<compile_context>
chip_gen: v7x
topology: tpu7x:2x2x1
jax: 0.10.0
libtpu: 0.0.40
codegen_flags: <defaults>
</compile_context>

<pallas_src>
import functools

import jax
import jax.numpy as jnp
from jax.experimental import pallas as pl
from jax.experimental.pallas import tpu as pltpu


# ----------------------------------------------------------------------------
# helpers
# ----------------------------------------------------------------------------
def _round_up(x, m):
    return ((x + m - 1) // m) * m


def _pad_2d(a, rows, cols, dtype):
    """Zero-pad a 2-D array up to (rows, cols) in the given dtype."""
    return jnp.zeros((rows, cols), dtype).at[: a.shape[0], : a.shape[1]].set(
        a.astype(dtype))


def _pick_tile(dim, candidates):
    for c in candidates:
        if dim % c == 0:
            return c
    return dim  # padding below guarantees a candidate hits; this is a safety net only


def _num_tensorcores():
    """2 TensorCores per chip on v7x, 1 on v5e/v6e."""
    try:
        kind = jax.devices()[0].device_kind.lower()
    except Exception:
        return 1
    return 2 if "v7" in kind else 1


# ----------------------------------------------------------------------------
# Kernel A: tiled GEMM + bias  (out = x @ w + b).  x/w bf16, acc/bias/out f32.
# Used for the vocab projection (the dominant, fully parallel GEMM).
# ----------------------------------------------------------------------------
def _matmul_bias_kernel(x_ref, w_ref, b_ref, o_ref, acc_ref):
    k = pl.program_id(2)

    @pl.when(k == 0)
    def _():
        acc_ref[...] = jnp.zeros_like(acc_ref)

    acc_ref[...] += jnp.dot(x_ref[...], w_ref[...],
                            preferred_element_type=jnp.float32)

    @pl.when(k == pl.num_programs(2) - 1)
    def _():
        o_ref[...] = (acc_ref[...] + b_ref[...]).astype(o_ref.dtype)


def _matmul_bias(x, w, b):
    """x: (M, K) bf16, w: (K, N) bf16, b: (1, N) f32 -> (M, N) f32."""
    M, K = x.shape
    _, N = w.shape
    # Padding in the wrapper guarantees: M mult of 64 (>=256 for t_block=32),
    # N mult of 512, K mult of 128 -> real tiles, never the full-dim fallback.
    tm = _pick_tile(M, (512, 256, 128, 64, 32, 16, 8))
    tn = _pick_tile(N, (512, 256, 128))
    tk = _pick_tile(K, (512, 256, 128))
    grid = (M // tm, N // tn, K // tk)

    return pl.pallas_call(
        _matmul_bias_kernel,
        out_shape=jax.ShapeDtypeStruct((M, N), jnp.float32),
        grid_spec=pltpu.PrefetchScalarGridSpec(
            num_scalar_prefetch=0,
            grid=grid,
            in_specs=[
                pl.BlockSpec((tm, tk), lambda i, j, k: (i, k)),
                pl.BlockSpec((tk, tn), lambda i, j, k: (k, j)),
                pl.BlockSpec((1, tn), lambda i, j, k: (0, j)),
            ],
            out_specs=pl.BlockSpec((tm, tn), lambda i, j, k: (i, j)),
            scratch_shapes=[pltpu.VMEM((tm, tn), jnp.float32)],
        ),
        compiler_params=pltpu.CompilerParams(
            dimension_semantics=("parallel", "parallel", "arbitrary"),
        ),
    )(x, w, b)


# ----------------------------------------------------------------------------
# Kernel B: fused input-projection + blocked RNN recurrence.
#   grid = (batch blocks [parallel], time blocks [arbitrary/sequential])
#   per grid step:
#     gates = emb_block @ W_ih + b_rnn          (one parallel GEMM, off crit path)
#     t_block statically-unrolled tanh(gates_t + h @ W_hh) steps
#     one full-block (unmasked) ctx store at the end
# ----------------------------------------------------------------------------
def _rnn_fused_kernel(len_ref, emb_ref, wih_ref, whh_ref, brnn_ref,
                      ctx_ref, h_ref, *, t_block):
    it = pl.program_id(1)

    @pl.when(it == 0)
    def _():
        h_ref[...] = jnp.zeros_like(h_ref)      # fresh hidden per batch block

    lengths = len_ref[...]                      # (b_block, H) int32, lane-broadcast
    b, t, e = emb_ref.shape

    # Block-entry gate GEMM: bf16 operands, f32 accumulation, f32 bias.
    x = emb_ref[...].reshape(b * t, e)          # bf16
    gates = jnp.dot(x, wih_ref[...], preferred_element_type=jnp.float32)
    gates = gates + brnn_ref[...]               # (b*t, H) + (1, H)
    gates = gates.reshape(b, t, -1)             # (b_block, t_block, H) f32

    # TODO(synk): for H <= 256 the recurrence matmul could pin W_hh in the MXU
    # via pltpu.matmul_push_rhs/matmul_acc_lhs instead of re-streaming it each step.
    whh = whh_ref[...]                          # (H, H) bf16
    h = h_ref[...]                              # (b_block, H) f32
    t0 = it * t_block

    outs = []
    # Static unroll: slices stay static, LLO scheduler sees the whole chain.
    for s in range(t_block):
        h_cand = jnp.tanh(
            gates[:, s, :] + jnp.dot(h.astype(jnp.bfloat16), whh,
                                     preferred_element_type=jnp.float32))
        valid = (t0 + s) < lengths              # (b_block, H) bool
        h = jnp.where(valid, h_cand, h)         # freeze hidden past length
        outs.append(jnp.where(valid, h_cand, 0.0))   # pad_packed zeros

    h_ref[...] = h
    # Single unmasked full-tile store instead of t_block masked sublane stores.
    ctx_ref[...] = jnp.stack(outs, axis=1).astype(ctx_ref.dtype)


def _rnn_recurrence(len_bcast, emb, w_ih, w_hh, b_rnn, *, t_block):
    B_pad, T_pad, E_pad = emb.shape
    H_pad = w_hh.shape[0]

    # Only split the batch when a second TensorCore exists (v7x).  On 1-TC
    # v5e/v6e a split just doubles the number of sequential recurrence steps.
    if _num_tensorcores() >= 2 and B_pad % 16 == 0:
        b_block = B_pad // 2
    else:
        b_block = B_pad
    grid = (B_pad // b_block, T_pad // t_block)

    kernel = functools.partial(_rnn_fused_kernel, t_block=t_block)
    return pl.pallas_call(
        kernel,
        out_shape=jax.ShapeDtypeStruct((B_pad, T_pad, H_pad), jnp.bfloat16),
        grid_spec=pltpu.PrefetchScalarGridSpec(
            num_scalar_prefetch=0,
            grid=grid,
            in_specs=[
                pl.BlockSpec((b_block, H_pad), lambda ib, it: (ib, 0)),            # lengths
                pl.BlockSpec((b_block, t_block, E_pad), lambda ib, it: (ib, it, 0)),  # emb
                # TODO(synk): for very large H on v7x, single-buffer these two
                # grid-invariant weight blocks (pipeline_mode=pl.Buffered(1)) and
                # raise vmem_limit_bytes; unnecessary at bf16 + these sizes.
                pl.BlockSpec((E_pad, H_pad), lambda ib, it: (0, 0)),               # W_ih
                pl.BlockSpec((H_pad, H_pad), lambda ib, it: (0, 0)),               # W_hh
                pl.BlockSpec((1, H_pad), lambda ib, it: (0, 0)),                   # b_rnn
            ],
            out_specs=pl.BlockSpec((b_block, t_block, H_pad),
                                   lambda ib, it: (ib, it, 0)),
            scratch_shapes=[pltpu.VMEM((b_block, H_pad), jnp.float32)],
        ),
        compiler_params=pltpu.CompilerParams(
            # TODO(synk): on v7x verify "parallel" shards the batch axis across the
            # two TensorCores; otherwise switch to pltpu.CORE_PARALLEL / pl.core_map.
            dimension_semantics=("parallel", "arbitrary"),
        ),
    )(len_bcast, emb, w_ih, w_hh, b_rnn)


# ----------------------------------------------------------------------------
# Full forward (padded core is jitted once per static padded shape)
# ----------------------------------------------------------------------------
@functools.partial(jax.jit, static_argnames=("t_block",))
def _lm_forward_padded(emb_p, len_bcast, w_ih, w_hh, b_rnn, w_out, b_out, *, t_block):
    B_pad, T_pad, _ = emb_p.shape
    H_pad = w_hh.shape[0]
    V_pad = w_out.shape[1]

    # 1+2) fused input projection + sequential recurrence -> (B,T,H) bf16
    ctx = _rnn_recurrence(len_bcast, emb_p, w_ih, w_hh, b_rnn, t_block=t_block)

    # 3) vocab projection as one big parallel GEMM, batch-major result (f32)
    logits = _matmul_bias(ctx.reshape(B_pad * T_pad, H_pad), w_out, b_out)
    return logits.reshape(B_pad, T_pad, V_pad)


def language_model_forward(indices, lengths, params, *, t_block=32):
    """indices: (B, L) int32, lengths: (B,) int -> logits (B, max(lengths), V) f32."""
    emb_table = params["embedding"]                      # (V, E), pad row is zero
    V, E = emb_table.shape
    H = params["w_hh"].shape[0]
    B, L = indices.shape
    pad_id = params["pad_id"]

    lengths = jnp.asarray(lengths, jnp.int32)
    # pad_packed_sequence trims time to max(lengths): resolve the (tiny) host sync
    # BEFORE dispatching the kernels so it does not serialize after them.
    t_max = int(jax.device_get(jnp.max(lengths)))

    # Layout / tile friendly padded shapes (B mult of 8, T mult of t_block,
    # E/H mult of 128, V mult of 512 so the projection gets wide-N tiles).
    t_block = max(8, min(t_block, _round_up(L, 8)))
    B_pad = _round_up(max(B, 8), 8)
    T_pad = _round_up(L, t_block)
    E_pad = _round_up(E, 128)
    H_pad = _round_up(H, 128)
    V_pad = _round_up(V, 512)

    # Embedding gather straight into the padded bf16 (B,T,E) layout (single gather).
    # torch's `indices[indices==pad_id] = padding_idx` is an identity -> dropped;
    # the padding_idx row of the table is zero, so padded positions embed to zero.
    table = jnp.zeros((V, E_pad), jnp.bfloat16).at[:, :E].set(
        emb_table.astype(jnp.bfloat16))
    idx_p = jnp.full((B_pad, T_pad), pad_id, jnp.int32).at[:B, :L].set(
        indices.astype(jnp.int32))
    emb_p = table[idx_p]                                 # (B_pad, T_pad, E_pad) bf16

    len_p = jnp.zeros((B_pad,), jnp.int32).at[:B].set(lengths)
    len_bcast = jnp.broadcast_to(len_p[:, None], (B_pad, H_pad))

    # bf16 weights (MXU-native), f32 biases (added post-accumulation).
    w_ih = _pad_2d(params["w_ih"], E_pad, H_pad, jnp.bfloat16)
    w_hh = _pad_2d(params["w_hh"], H_pad, H_pad, jnp.bfloat16)
    w_out = _pad_2d(params["w_out"], H_pad, V_pad, jnp.bfloat16)
    b_rnn = _pad_2d(params["b_rnn"], 1, H_pad, jnp.float32)
    b_out = _pad_2d(params["b_out"], 1, V_pad, jnp.float32)

    logits_p = _lm_forward_padded(emb_p, len_bcast, w_ih, w_hh, b_rnn,
                                  w_out, b_out, t_block=t_block)
    return logits_p[:B, :t_max, :V]


# ----------------------------------------------------------------------------
# Pure-JAX f32 reference mirroring the PyTorch semantics, for verification
# ----------------------------------------------------------------------------
def _reference_forward(indices, lengths, params):
    emb = params["embedding"][indices]                   # (B, L, E)
    t_max = int(jax.device_get(jnp.max(lengths)))
    emb = emb[:, :t_max, :]
    B = emb.shape[0]
    H = params["w_hh"].shape[0]

    def step(h, inp):
        x_t, t = inp
        h_cand = jnp.tanh(x_t @ params["w_ih"] + h @ params["w_hh"]
                          + params["b_rnn"])
        valid = (t < lengths)[:, None]
        h_new = jnp.where(valid, h_cand, h)
        ctx = jnp.where(valid, h_cand, 0.0)
        return h_new, ctx

    h0 = jnp.zeros((B, H), jnp.float32)
    xs = (jnp.transpose(emb, (1, 0, 2)).astype(jnp.float32),
          jnp.arange(t_max, dtype=jnp.int32))
    _, ctx_tme = jax.lax.scan(step, h0, xs)
    logits_tme = ctx_tme @ params["w_out"] + params["b_out"]
    return jnp.transpose(logits_tme, (1, 0, 2))


def init_params(key, vocab_size, embed_size, hidden_size, pad_id):
    ks = jax.random.split(key, 7)
    k_rnn = 1.0 / jnp.sqrt(hidden_size)
    k_lin = 1.0 / jnp.sqrt(hidden_size)

    emb = jax.random.normal(ks[0], (vocab_size, embed_size), jnp.float32)
    emb = emb.at[pad_id].set(0.0)                        # padding_idx row is zero

    w_ih = jax.random.uniform(ks[1], (embed_size, hidden_size), jnp.float32,
                              -k_rnn, k_rnn)
    w_hh = jax.random.uniform(ks[2], (hidden_size, hidden_size), jnp.float32,
                              -k_rnn, k_rnn)
    b_ih = jax.random.uniform(ks[3], (hidden_size,), jnp.float32, -k_rnn, k_rnn)
    b_hh = jax.random.uniform(ks[4], (hidden_size,), jnp.float32, -k_rnn, k_rnn)
    w_out = jax.random.uniform(ks[5], (hidden_size, vocab_size), jnp.float32,
                               -k_lin, k_lin)
    b_out = jax.random.uniform(ks[6], (vocab_size,), jnp.float32, -k_lin, k_lin)

    return {
        "pad_id": pad_id,
        "embedding": emb,
        "w_ih": w_ih,
        "w_hh": w_hh,
        "b_rnn": (b_ih + b_hh).reshape(1, hidden_size),
        "w_out": w_out,
        "b_out": b_out.reshape(1, vocab_size),
    }


if __name__ == "__main__":
    VOCAB, EMBED, HIDDEN = 40, 32, 32
    B, L = 2, 8
    PAD_ID = 0

    key = jax.random.PRNGKey(0)
    k_param, k_tok = jax.random.split(key)
    params = init_params(k_param, VOCAB, EMBED, HIDDEN, PAD_ID)

    lengths = jnp.array([8, 5], dtype=jnp.int32)
    tokens = jax.random.randint(k_tok, (B, L), 1, VOCAB, dtype=jnp.int32)
    pos = jnp.arange(L)[None, :]
    indices = jnp.where(pos < lengths[:, None], tokens, PAD_ID)

    logits = language_model_forward(indices, lengths, params)
    jax.block_until_ready(logits)

    ref = _reference_forward(indices, lengths, params)
    assert logits.shape == ref.shape, (logits.shape, ref.shape)
    err = float(jnp.max(jnp.abs(logits - ref)))
    # bf16 operands with f32 accumulation vs. an all-f32 reference: ~1e-2 expected.
    assert err < 1e-1, err

    print("KERNEL_OK")
</pallas_src>

<mosaic_0001>
module attributes {stable_mosaic.version = 11 : i64} {
  func.func @_matmul_bias_kernel(%arg0: i32, %arg1: i32, %arg2: i32, %arg3: memref<64x128xbf16, #tpu.memory_space<vmem>>, %arg4: memref<128x512xbf16, #tpu.memory_space<vmem>>, %arg5: memref<1x512xf32, #tpu.memory_space<vmem>>, %arg6: memref<64x512xf32, #tpu.memory_space<vmem>>, %arg7: memref<64x512xf32, #tpu.memory_space<vmem>>) attributes {dimension_semantics = [#tpu.dimension_semantics<parallel>, #tpu.dimension_semantics<parallel>, #tpu.dimension_semantics<arbitrary>], iteration_bounds = array<i64: 1, 1, 1>, scalar_prefetch = 0 : i64, scratch_operands = 1 : i64, tpu.core_type = #tpu.core_type<tc>, window_params = [{transform_indices = @transform_0, window_bounds = array<i64: 64, 128>}, {transform_indices = @transform_1, window_bounds = array<i64: 128, 512>}, {transform_indices = @transform_2, window_bounds = array<i64: 1, 512>}, {transform_indices = @transform_3, window_bounds = array<i64: 64, 512>}]} {
    %c0_i32 = arith.constant 0 : i32
    %0 = arith.cmpi eq, %arg2, %c0_i32 : i32
    %1 = arith.extui %0 : i1 to i32
    %c0_i32_0 = arith.constant 0 : i32
    %2 = arith.cmpi ne, %1, %c0_i32_0 : i32
    scf.if %2 {
      %cst_10 = arith.constant 0.000000e+00 : f32
      %12 = vector.broadcast %cst_10 : f32 to vector<64x512xf32>
      %c0_11 = arith.constant 0 : index
      %c0_12 = arith.constant 0 : index
      %13 = vector.load %arg7[%c0_11, %c0_12] : memref<64x512xf32, #tpu.memory_space<vmem>>, vector<64x512xf32>
      tpu.vector_store %arg7[%c0_11, %c0_12], %12 {strides = array<i32>} : memref<64x512xf32, #tpu.memory_space<vmem>>, vector<64x512xf32>,
    } else {
    }
    %c0 = arith.constant 0 : index
    %c0_1 = arith.constant 0 : index
    %3 = vector.load %arg7[%c0, %c0_1] : memref<64x512xf32, #tpu.memory_space<vmem>>, vector<64x512xf32>
    %c0_2 = arith.constant 0 : index
    %c0_3 = arith.constant 0 : index
    %4 = vector.load %arg3[%c0_2, %c0_3] : memref<64x128xbf16, #tpu.memory_space<vmem>>, vector<64x128xbf16>
    %c0_4 = arith.constant 0 : index
    %c0_5 = arith.constant 0 : index
    %5 = vector.load %arg4[%c0_4, %c0_5] : memref<128x512xbf16, #tpu.memory_space<vmem>>, vector<128x512xbf16>
    %cst = arith.constant dense<0.000000e+00> : vector<64x512xf32>
    %6 = tpu.matmul %4, %5, %cst {dimension_numbers = #tpu.dot_dimension_numbers<[1], [0], [0], [1], [0, 0, 1, 1], [], []>} : vector<64x128xbf16>, vector<128x512xbf16>, vector<64x512xf32> -> vector<64x512xf32>
    %7 = arith.addf %3, %6 : vector<64x512xf32>
    %c0_6 = arith.constant 0 : index
    %c0_7 = arith.constant 0 : index
    %8 = vector.load %arg7[%c0_6, %c0_7] : memref<64x512xf32, #tpu.memory_space<vmem>>, vector<64x512xf32>
    tpu.vector_store %arg7[%c0_6, %c0_7], %7 {strides = array<i32>} : memref<64x512xf32, #tpu.memory_space<vmem>>, vector<64x512xf32>,
    %c0_i32_8 = arith.constant 0 : i32
    %9 = arith.cmpi eq, %arg2, %c0_i32_8 : i32
    %10 = arith.extui %9 : i1 to i32
    %c0_i32_9 = arith.constant 0 : i32
    %11 = arith.cmpi ne, %10, %c0_i32_9 : i32
    scf.if %11 {
      %c0_10 = arith.constant 0 : index
      %c0_11 = arith.constant 0 : index
      %12 = vector.load %arg7[%c0_10, %c0_11] : memref<64x512xf32, #tpu.memory_space<vmem>>, vector<64x512xf32>
      %c0_12 = arith.constant 0 : index
      %c0_13 = arith.constant 0 : index
      %13 = vector.load %arg5[%c0_12, %c0_13] : memref<1x512xf32, #tpu.memory_space<vmem>>, vector<1x512xf32>
      %14 = vector.broadcast %13 : vector<1x512xf32> to vector<64x512xf32>
      %15 = arith.addf %12, %14 : vector<64x512xf32>
      %c0_14 = arith.constant 0 : index
      %c0_15 = arith.constant 0 : index
      %16 = vector.load %arg6[%c0_14, %c0_15] : memref<64x512xf32, #tpu.memory_space<vmem>>, vector<64x512xf32>
      tpu.vector_store %arg6[%c0_14, %c0_15], %15 {strides = array<i32>} : memref<64x512xf32, #tpu.memory_space<vmem>>, vector<64x512xf32>,
    } else {
    }
    return
  }
  func.func @transform_0(%arg0: i32, %arg1: i32, %arg2: i32) -> (i32, i32) {
    %c0_i32 = arith.constant 0 : i32
    return %arg0, %arg2 : i32, i32
  }
  func.func @transform_1(%arg0: i32, %arg1: i32, %arg2: i32) -> (i32, i32) {
    %c0_i32 = arith.constant 0 : i32
    return %arg2, %arg1 : i32, i32
  }
  func.func @transform_2(%arg0: i32, %arg1: i32, %arg2: i32) -> (i32, i32) {
    %c0_i32 = arith.constant 0 : i32
    %c0_i32_0 = arith.constant 0 : i32
    return %c0_i32, %arg1 : i32, i32
  }
  func.func @transform_3(%arg0: i32, %arg1: i32, %arg2: i32) -> (i32, i32) {
    %c0_i32 = arith.constant 0 : i32
    return %arg0, %arg1 : i32, i32
  }
}

module attributes {stable_mosaic.version = 11 : i64} {
  func.func @_rnn_fused_kernel(%arg0: i32, %arg1: i32, %arg2: memref<8x128xi32, #tpu.memory_space<vmem>>, %arg3: memref<8x8x128xbf16, #tpu.memory_space<vmem>>, %arg4: memref<128x128xbf16, #tpu.memory_space<vmem>>, %arg5: memref<128x128xbf16, #tpu.memory_space<vmem>>, %arg6: memref<1x128xf32, #tpu.memory_space<vmem>>, %arg7: memref<8x8x128xbf16, #tpu.memory_space<vmem>>, %arg8: memref<8x128xf32, #tpu.memory_space<vmem>>) attributes {dimension_semantics = [#tpu.dimension_semantics<parallel>, #tpu.dimension_semantics<arbitrary>], iteration_bounds = array<i64: 1, 1>, scalar_prefetch = 0 : i64, scratch_operands = 1 : i64, tpu.core_type = #tpu.core_type<tc>, window_params = [{transform_indices = @transform_0, window_bounds = array<i64: 8, 128>}, {transform_indices = @transform_1, window_bounds = array<i64: 8, 8, 128>}, {pipeline_mode = #tpu.pipeline_mode<synchronous>, transform_indices = @transform_2, window_bounds = array<i64: 128, 128>}, {pipeline_mode = #tpu.pipeline_mode<synchronous>, transform_indices = @transform_3, window_bounds = array<i64: 128, 128>}, {pipeline_mode = #tpu.pipeline_mode<synchronous>, transform_indices = @transform_4, window_bounds = array<i64: 1, 128>}, {transform_indices = @transform_5, window_bounds = array<i64: 8, 8, 128>}]} {
    %c0_i32 = arith.constant 0 : i32
    %0 = arith.cmpi eq, %arg1, %c0_i32 : i32
    %1 = arith.extui %0 : i1 to i32
    %c0_i32_0 = arith.constant 0 : i32
    %2 = arith.cmpi ne, %1, %c0_i32_0 : i32
    scf.if %2 {
      %cst_35 = arith.constant 0.000000e+00 : f32
      %123 = vector.broadcast %cst_35 : f32 to vector<8x128xf32>
      %c0_36 = arith.constant 0 : index
      %c0_37 = arith.constant 0 : index
      %124 = vector.load %arg8[%c0_36, %c0_37] : memref<8x128xf32, #tpu.memory_space<vmem>>, vector<8x128xf32>
      tpu.vector_store %arg8[%c0_36, %c0_37], %123 {strides = array<i32>} : memref<8x128xf32, #tpu.memory_space<vmem>>, vector<8x128xf32>,
    } else {
    }
    %c0 = arith.constant 0 : index
    %c0_1 = arith.constant 0 : index
    %3 = vector.load %arg2[%c0, %c0_1] : memref<8x128xi32, #tpu.memory_space<vmem>>, vector<8x128xi32>
    %c0_2 = arith.constant 0 : index
    %c0_3 = arith.constant 0 : index
    %c0_4 = arith.constant 0 : index
    %4 = vector.load %arg3[%c0_2, %c0_3, %c0_4] : memref<8x8x128xbf16, #tpu.memory_space<vmem>>, vector<8x8x128xbf16>
    %5 = vector.shape_cast %4 : vector<8x8x128xbf16> to vector<64x128xbf16>
    %c0_5 = arith.constant 0 : index
    %c0_6 = arith.constant 0 : index
    %6 = vector.load %arg4[%c0_5, %c0_6] : memref<128x128xbf16, #tpu.memory_space<vmem>>, vector<128x128xbf16>
    %cst = arith.constant dense<0.000000e+00> : vector<64x128xf32>
    %7 = tpu.matmul %5, %6, %cst {dimension_numbers = #tpu.dot_dimension_numbers<[1], [0], [0], [1], [0, 0, 1, 1], [], []>} : vector<64x128xbf16>, vector<128x128xbf16>, vector<64x128xf32> -> vector<64x128xf32>
    %c0_7 = arith.constant 0 : index
    %c0_8 = arith.constant 0 : index
    %8 = vector.load %arg6[%c0_7, %c0_8] : memref<1x128xf32, #tpu.memory_space<vmem>>, vector<1x128xf32>
    %9 = vector.broadcast %8 : vector<1x128xf32> to vector<64x128xf32>
    %10 = arith.addf %7, %9 : vector<64x128xf32>
    %11 = vector.shape_cast %10 : vector<64x128xf32> to vector<8x8x128xf32>
    %c0_9 = arith.constant 0 : index
    %c0_10 = arith.constant 0 : index
    %12 = vector.load %arg5[%c0_9, %c0_10] : memref<128x128xbf16, #tpu.memory_space<vmem>>, vector<128x128xbf16>
    %c0_11 = arith.constant 0 : index
    %c0_12 = arith.constant 0 : index
    %13 = vector.load %arg8[%c0_11, %c0_12] : memref<8x128xf32, #tpu.memory_space<vmem>>, vector<8x128xf32>
    %c8_i32 = arith.constant 8 : i32
    %14 = arith.muli %arg1, %c8_i32 : i32
    %15 = vector.extract_strided_slice %11 {offsets = [0, 0, 0], sizes = [8, 1, 128], strides = [1, 1, 1]} : vector<8x8x128xf32> to vector<8x1x128xf32>
    %16 = vector.shape_cast %15 : vector<8x1x128xf32> to vector<8x128xf32>
    %17 = arith.truncf %13 : vector<8x128xf32> to vector<8x128xbf16>
    %cst_13 = arith.constant dense<0.000000e+00> : vector<8x128xf32>
    %18 = tpu.matmul %17, %12, %cst_13 {dimension_numbers = #tpu.dot_dimension_numbers<[1], [0], [0], [1], [0, 0, 1, 1], [], []>} : vector<8x128xbf16>, vector<128x128xbf16>, vector<8x128xf32> -> vector<8x128xf32>
    %19 = arith.addf %16, %18 : vector<8x128xf32>
    %20 = math.tanh %19 : vector<8x128xf32>
    %c0_i32_14 = arith.constant 0 : i32
    %21 = arith.addi %14, %c0_i32_14 : i32
    %22 = vector.broadcast %21 : i32 to vector<8x128xi32>
    %23 = arith.cmpi slt, %22, %3 : vector<8x128xi32>
    %24 = arith.select %23, %20, %13 : vector<8x128xi1>, vector<8x128xf32>
    %cst_15 = arith.constant 0.000000e+00 : f32
    %25 = vector.broadcast %cst_15 : f32 to vector<8x128xf32>
    %26 = arith.select %23, %20, %25 : vector<8x128xi1>, vector<8x128xf32>
    %27 = vector.extract_strided_slice %11 {offsets = [0, 1, 0], sizes = [8, 1, 128], strides = [1, 1, 1]} : vector<8x8x128xf32> to vector<8x1x128xf32>
    %28 = vector.shape_cast %27 : vector<8x1x128xf32> to vector<8x128xf32>
    %29 = arith.truncf %24 : vector<8x128xf32> to vector<8x128xbf16>
    %cst_16 = arith.constant dense<0.000000e+00> : vector<8x128xf32>
    %30 = tpu.matmul %29, %12, %cst_16 {dimension_numbers = #tpu.dot_dimension_numbers<[1], [0], [0], [1], [0, 0, 1, 1], [], []>} : vector<8x128xbf16>, vector<128x128xbf16>, vector<8x128xf32> -> vector<8x128xf32>
    %31 = arith.addf %28, %30 : vector<8x128xf32>
    %32 = math.tanh %31 : vector<8x128xf32>
    %c1_i32 = arith.constant 1 : i32
    %33 = arith.addi %14, %c1_i32 : i32
    %34 = vector.broadcast %33 : i32 to vector<8x128xi32>
    %35 = arith.cmpi slt, %34, %3 : vector<8x128xi32>
    %36 = arith.select %35, %32, %24 : vector<8x128xi1>, vector<8x128xf32>
    %cst_17 = arith.constant 0.000000e+00 : f32
    %37 = vector.broadcast %cst_17 : f32 to vector<8x128xf32>
    %38 = arith.select %35, %32, %37 : vector<8x128xi1>, vector<8x128xf32>
    %39 = vector.extract_strided_slice %11 {offsets = [0, 2, 0], sizes = [8, 1, 128], strides = [1, 1, 1]} : vector<8x8x128xf32> to vector<8x1x128xf32>
    %40 = vector.shape_cast %39 : vector<8x1x128xf32> to vector<8x128xf32>
    %41 = arith.truncf %36 : vector<8x128xf32> to vector<8x128xbf16>
    %cst_18 = arith.constant dense<0.000000e+00> : vector<8x128xf32>
    %42 = tpu.matmul %41, %12, %cst_18 {dimension_numbers = #tpu.dot_dimension_numbers<[1], [0], [0], [1], [0, 0, 1, 1], [], []>} : vector<8x128xbf16>, vector<128x128xbf16>, vector<8x128xf32> -> vector<8x128xf32>
    %43 = arith.addf %40, %42 : vector<8x128xf32>
    %44 = math.tanh %43 : vector<8x128xf32>
    %c2_i32 = arith.constant 2 : i32
    %45 = arith.addi %14, %c2_i32 : i32
    %46 = vector.broadcast %45 : i32 to vector<8x128xi32>
    %47 = arith.cmpi slt, %46, %3 : vector<8x128xi32>
    %48 = arith.select %47, %44, %36 : vector<8x128xi1>, vector<8x128xf32>
    %cst_19 = arith.constant 0.000000e+00 : f32
    %49 = vector.broadcast %cst_19 : f32 to vector<8x128xf32>
    %50 = arith.select %47, %44, %49 : vector<8x128xi1>, vector<8x128xf32>
    %51 = vector.extract_strided_slice %11 {offsets = [0, 3, 0], sizes = [8, 1, 128], strides = [1, 1, 1]} : vector<8x8x128xf32> to vector<8x1x128xf32>
    %52 = vector.shape_cast %51 : vector<8x1x128xf32> to vector<8x128xf32>
    %53 = arith.truncf %48 : vector<8x128xf32> to vector<8x128xbf16>
    %cst_20 = arith.constant dense<0.000000e+00> : vector<8x128xf32>
    %54 = tpu.matmul %53, %12, %cst_20 {dimension_numbers = #tpu.dot_dimension_numbers<[1], [0], [0], [1], [0, 0, 1, 1], [], []>} : vector<8x128xbf16>, vector<128x128xbf16>, vector<8x128xf32> -> vector<8x128xf32>
    %55 = arith.addf %52, %54 : vector<8x128xf32>
    %56 = math.tanh %55 : vector<8x128xf32>
    %c3_i32 = arith.constant 3 : i32
    %57 = arith.addi %14, %c3_i32 : i32
    %58 = vector.broadcast %57 : i32 to vector<8x128xi32>
    %59 = arith.cmpi slt, %58, %3 : vector<8x128xi32>
    %60 = arith.select %59, %56, %48 : vector<8x128xi1>, vector<8x128xf32>
    %cst_21 = arith.constant 0.000000e+00 : f32
    %61 = vector.broadcast %cst_21 : f32 to vector<8x128xf32>
    %62 = arith.select %59, %56, %61 : vector<8x128xi1>, vector<8x128xf32>
    %63 = vector.extract_strided_slice %11 {offsets = [0, 4, 0], sizes = [8, 1, 128], strides = [1, 1, 1]} : vector<8x8x128xf32> to vector<8x1x128xf32>
    %64 = vector.shape_cast %63 : vector<8x1x128xf32> to vector<8x128xf32>
    %65 = arith.truncf %60 : vector<8x128xf32> to vector<8x128xbf16>
    %cst_22 = arith.constant dense<0.000000e+00> : vector<8x128xf32>
    %66 = tpu.matmul %65, %12, %cst_22 {dimension_numbers = #tpu.dot_dimension_numbers<[1], [0], [0], [1], [0, 0, 1, 1], [], []>} : vector<8x128xbf16>, vector<128x128xbf16>, vector<8x128xf32> -> vector<8x128xf32>
    %67 = arith.addf %64, %66 : vector<8x128xf32>
    %68 = math.tanh %67 : vector<8x128xf32>
    %c4_i32 = arith.constant 4 : i32
    %69 = arith.addi %14, %c4_i32 : i32
    %70 = vector.broadcast %69 : i32 to vector<8x128xi32>
    %71 = arith.cmpi slt, %70, %3 : vector<8x128xi32>
    %72 = arith.select %71, %68, %60 : vector<8x128xi1>, vector<8x128xf32>
    %cst_23 = arith.constant 0.000000e+00 : f32
    %73 = vector.broadcast %cst_23 : f32 to vector<8x128xf32>
    %74 = arith.select %71, %68, %73 : vector<8x128xi1>, vector<8x128xf32>
    %75 = vector.extract_strided_slice %11 {offsets = [0, 5, 0], sizes = [8, 1, 128], strides = [1, 1, 1]} : vector<8x8x128xf32> to vector<8x1x128xf32>
    %76 = vector.shape_cast %75 : vector<8x1x128xf32> to vector<8x128xf32>
    %77 = arith.truncf %72 : vector<8x128xf32> to vector<8x128xbf16>
    %cst_24 = arith.constant dense<0.000000e+00> : vector<8x128xf32>
    %78 = tpu.matmul %77, %12, %cst_24 {dimension_numbers = #tpu.dot_dimension_numbers<[1], [0], [0], [1], [0, 0, 1, 1], [], []>} : vector<8x128xbf16>, vector<128x128xbf16>, vector<8x128xf32> -> vector<8x128xf32>
    %79 = arith.addf %76, %78 : vector<8x128xf32>
    %80 = math.tanh %79 : vector<8x128xf32>
    %c5_i32 = arith.constant 5 : i32
    %81 = arith.addi %14, %c5_i32 : i32
    %82 = vector.broadcast %81 : i32 to vector<8x128xi32>
    %83 = arith.cmpi slt, %82, %3 : vector<8x128xi32>
    %84 = arith.select %83, %80, %72 : vector<8x128xi1>, vector<8x128xf32>
    %cst_25 = arith.constant 0.000000e+00 : f32
    %85 = vector.broadcast %cst_25 : f32 to vector<8x128xf32>
    %86 = arith.select %83, %80, %85 : vector<8x128xi1>, vector<8x128xf32>
    %87 = vector.extract_strided_slice %11 {offsets = [0, 6, 0], sizes = [8, 1, 128], strides = [1, 1, 1]} : vector<8x8x128xf32> to vector<8x1x128xf32>
    %88 = vector.shape_cast %87 : vector<8x1x128xf32> to vector<8x128xf32>
    %89 = arith.truncf %84 : vector<8x128xf32> to vector<8x128xbf16>
    %cst_26 = arith.constant dense<0.000000e+00> : vector<8x128xf32>
    %90 = tpu.matmul %89, %12, %cst_26 {dimension_numbers = #tpu.dot_dimension_numbers<[1], [0], [0], [1], [0, 0, 1, 1], [], []>} : vector<8x128xbf16>, vector<128x128xbf16>, vector<8x128xf32> -> vector<8x128xf32>
    %91 = arith.addf %88, %90 : vector<8x128xf32>
    %92 = math.tanh %91 : vector<8x128xf32>
    %c6_i32 = arith.constant 6 : i32
    %93 = arith.addi %14, %c6_i32 : i32
    %94 = vector.broadcast %93 : i32 to vector<8x128xi32>
    %95 = arith.cmpi slt, %94, %3 : vector<8x128xi32>
    %96 = arith.select %95, %92, %84 : vector<8x128xi1>, vector<8x128xf32>
    %cst_27 = arith.constant 0.000000e+00 : f32
    %97 = vector.broadcast %cst_27 : f32 to vector<8x128xf32>
    %98 = arith.select %95, %92, %97 : vector<8x128xi1>, vector<8x128xf32>
    %99 = vector.extract_strided_slice %11 {offsets = [0, 7, 0], sizes = [8, 1, 128], strides = [1, 1, 1]} : vector<8x8x128xf32> to vector<8x1x128xf32>
    %100 = vector.shape_cast %99 : vector<8x1x128xf32> to vector<8x128xf32>
    %101 = arith.truncf %96 : vector<8x128xf32> to vector<8x128xbf16>
    %cst_28 = arith.constant dense<0.000000e+00> : vector<8x128xf32>
    %102 = tpu.matmul %101, %12, %cst_28 {dimension_numbers = #tpu.dot_dimension_numbers<[1], [0], [0], [1], [0, 0, 1, 1], [], []>} : vector<8x128xbf16>, vector<128x128xbf16>, vector<8x128xf32> -> vector<8x128xf32>
    %103 = arith.addf %100, %102 : vector<8x128xf32>
    %104 = math.tanh %103 : vector<8x128xf32>
    %c7_i32 = arith.constant 7 : i32
    %105 = arith.addi %14, %c7_i32 : i32
    %106 = vector.broadcast %105 : i32 to vector<8x128xi32>
    %107 = arith.cmpi slt, %106, %3 : vector<8x128xi32>
    %108 = arith.select %107, %104, %96 : vector<8x128xi1>, vector<8x128xf32>
    %cst_29 = arith.constant 0.000000e+00 : f32
    %109 = vector.broadcast %cst_29 : f32 to vector<8x128xf32>
    %110 = arith.select %107, %104, %109 : vector<8x128xi1>, vector<8x128xf32>
    %c0_30 = arith.constant 0 : index
    %c0_31 = arith.constant 0 : index
    %111 = vector.load %arg8[%c0_30, %c0_31] : memref<8x128xf32, #tpu.memory_space<vmem>>, vector<8x128xf32>
    tpu.vector_store %arg8[%c0_30, %c0_31], %108 {strides = array<i32>} : memref<8x128xf32, #tpu.memory_space<vmem>>, vector<8x128xf32>,
    %112 = vector.shape_cast %26 : vector<8x128xf32> to vector<8x1x128xf32>
    %113 = vector.shape_cast %38 : vector<8x128xf32> to vector<8x1x128xf32>
    %114 = vector.shape_cast %50 : vector<8x128xf32> to vector<8x1x128xf32>
    %115 = vector.shape_cast %62 : vector<8x128xf32> to vector<8x1x128xf32>
    %116 = vector.shape_cast %74 : vector<8x128xf32> to vector<8x1x128xf32>
    %117 = vector.shape_cast %86 : vector<8x128xf32> to vector<8x1x128xf32>
    %118 = vector.shape_cast %98 : vector<8x128xf32> to vector<8x1x128xf32>
    %119 = vector.shape_cast %110 : vector<8x128xf32> to vector<8x1x128xf32>
    %120 = tpu.concatenate %112, %113, %114, %115, %116, %117, %118, %119 in 1 : vector<8x1x128xf32>, vector<8x1x128xf32>, vector<8x1x128xf32>, vector<8x1x128xf32>, vector<8x1x128xf32>, vector<8x1x128xf32>, vector<8x1x128xf32>, vector<8x1x128xf32> -> vector<8x8x128xf32>
    %121 = arith.truncf %120 : vector<8x8x128xf32> to vector<8x8x128xbf16>
    %c0_32 = arith.constant 0 : index
    %c0_33 = arith.constant 0 : index
    %c0_34 = arith.constant 0 : index
    %122 = vector.load %arg7[%c0_32, %c0_33, %c0_34] : memref<8x8x128xbf16, #tpu.memory_space<vmem>>, vector<8x8x128xbf16>
    tpu.vector_store %arg7[%c0_32, %c0_33, %c0_34], %121 {strides = array<i32>} : memref<8x8x128xbf16, #tpu.memory_space<vmem>>, vector<8x8x128xbf16>,
    return
  }
  func.func @transform_0(%arg0: i32, %arg1: i32) -> (i32, i32) {
    %c0_i32 = arith.constant 0 : i32
    %c0_i32_0 = arith.constant 0 : i32
    return %arg0, %c0_i32 : i32, i32
  }
  func.func @transform_1(%arg0: i32, %arg1: i32) -> (i32, i32, i32) {
    %c0_i32 = arith.constant 0 : i32
    %c0_i32_0 = arith.constant 0 : i32
    return %arg0, %arg1, %c0_i32 : i32, i32, i32
  }
  func.func @transform_2(%arg0: i32, %arg1: i32) -> (i32, i32) {
    %c0_i32 = arith.constant 0 : i32
    %c0_i32_0 = arith.constant 0 : i32
    %c0_i32_1 = arith.constant 0 : i32
    return %c0_i32, %c0_i32_0 : i32, i32
  }
  func.func @transform_3(%arg0: i32, %arg1: i32) -> (i32, i32) {
    %c0_i32 = arith.constant 0 : i32
    %c0_i32_0 = arith.constant 0 : i32
    %c0_i32_1 = arith.constant 0 : i32
    return %c0_i32, %c0_i32_0 : i32, i32
  }
  func.func @transform_4(%arg0: i32, %arg1: i32) -> (i32, i32) {
    %c0_i32 = arith.constant 0 : i32
    %c0_i32_0 = arith.constant 0 : i32
    %c0_i32_1 = arith.constant 0 : i32
    return %c0_i32, %c0_i32_0 : i32, i32
  }
  func.func @transform_5(%arg0: i32, %arg1: i32) -> (i32, i32, i32) {
    %c0_i32 = arith.constant 0 : i32
    %c0_i32_0 = arith.constant 0 : i32
    return %arg0, %arg1, %c0_i32 : i32, i32, i32
  }
}

</mosaic_0001>

<llo_original>
// kernel: _lm_forward_padded.2
$region0: #{_lm_forward_padded.2}
  #allocation0 [shape = 'u32[]', space=smem, size = 0x4, offset = 0x4, fixed_abs, tag = 'smem constant byte address 0x4 - core index']
  #allocation1 [shape = 'u32[144,128]{1,0:T(1,128)}', space=vmem, size = 0x12000, scoped, tag = 'internal scratch']
  #allocation2 [shape = 'f32[8,128]{1,0:T(8,128)}', space=vmem, size = 0x1000, scoped, tag = 'scratch operand']
  %s0 = inlined_call_operand.hbm [shape: s32[8,128], index: 0, kind: input, shape index: {}]
  %s1 = inlined_call_operand.hbm [shape: bf16[8,8,128], index: 1, kind: input, shape index: {}]
  %s2 = inlined_call_operand.hbm [shape: bf16[128,128], index: 2, kind: input, shape index: {}]
  %s3 = inlined_call_operand.hbm [shape: bf16[128,128], index: 3, kind: input, shape index: {}]
  %s4 = inlined_call_operand.vmem [shape: f32[1,128], index: 4, kind: input, shape index: {}]
  %s5 = inlined_call_operand.vmem [shape: bf16[8,8,128], index: 5, kind: output, shape index: {}]
  %s6 = sld [smem:[#allocation0]]
  $region50: #{_lm_forward_padded.2} parent=0
    _
  %s8 = ssub.s32 1, %s6
  %s9 = scalar_select 0, %s8, %s6
  $region1: #{_lm_forward_padded.2} parent=0
    #allocation3 [shape = 'u8[4096]{0}', space=vmem, size = 0x1000, scoped, tag = 'input window, operand 0, single buffered']
    #allocation4 [shape = 's32[1]{0}', space=sflag, size = 0x4, scoped, tag = 'scoped memory for _lm_forward_padded.2']
    #allocation5 [shape = 'u8[16384]{0}', space=vmem, size = 0x4000, scoped, tag = 'input window, operand 1, single buffered']
    #allocation6 [shape = 's32[1]{0}', space=sflag, size = 0x4, scoped, tag = 'scoped memory for _lm_forward_padded.2']
    #allocation7 [shape = 'u8[32768]{0}', space=vmem, size = 0x8000, scoped, tag = 'input window, operand 2, single buffered']
    #allocation8 [shape = 'u8[32768]{0}', space=vmem, size = 0x8000, scoped, tag = 'input window, operand 3, single buffered']
    #allocation9 [shape = 's32[1]{0}', space=sflag, size = 0x4, scoped, tag = 'scoped memory for _lm_forward_padded.2']
    %10 = vsyncpa [#allocation4], 0
    %11 = vsyncpa [#allocation6], 0
    %12 = vsyncpa [#allocation9], 0
    // Predicated region
    $region2: #{_lm_forward_padded.2} parent=1 // pred_check
      _
    $region3: #{_lm_forward_padded.2} parent=1 // pred_check_branch
      %14 = sbr.rel (0) target = $region5
    $region4: #{_lm_forward_padded.2} parent=1 // pred_region
      %s16 = ssub.s32 128, 128
      %17 = vsyncadd [#allocation4], %s16
      %s19 = sshll.u32 [#allocation3], 4
      %s20 = int_to_ptr.vmem [resolvable:$true] %s19
      %22 = dma.hbm_to_vmem [thread:$0]  %s0, 128, %s20, [#allocation4]
    $region5: #{_lm_forward_padded.2} parent=1 // pred_fallthru
      _
    // Predicated region
    $region6: #{_lm_forward_padded.2} parent=1 // pred_check
      _
    $region7: #{_lm_forward_padded.2} parent=1 // pred_check_branch
      %24 = sbr.rel (0) target = $region9
    $region8: #{_lm_forward_padded.2} parent=1 // pred_region
      %s26 = ssub.s32 512, 512
      %27 = vsyncadd [#allocation6], %s26
      %s28 = sshll.u32 [#allocation5], 4
      %s29 = int_to_ptr.vmem [resolvable:$true] %s28
      %34 = dma.hbm_to_vmem [thread:$0]  %s1, 512, %s29, [#allocation6], 64, 64, 4
    $region9: #{_lm_forward_padded.2} parent=1 // pred_fallthru
      _
    // Predicated region
    $region10: #{_lm_forward_padded.2} parent=1 // pred_check
      _
    $region11: #{_lm_forward_padded.2} parent=1 // pred_check_branch
      %36 = sbr.rel (0) target = $region13
    $region12: #{_lm_forward_padded.2} parent=1 // pred_region
      %s38 = ssub.s32 1024, 1024
      %39 = vsyncadd [#allocation6], %s38
      %s40 = sshll.u32 [#allocation7], 4
      %s41 = int_to_ptr.vmem [resolvable:$true] %s40
      %46 = dma.hbm_to_vmem [thread:$0]  %s2, 1024, %s41, [#allocation6], 64, 64, 4
    $region13: #{_lm_forward_padded.2} parent=1 // pred_fallthru
      _
    // Predicated region
    $region14: #{_lm_forward_padded.2} parent=1 // pred_check
      _
    $region15: #{_lm_forward_padded.2} parent=1 // pred_check_branch
      %48 = sbr.rel (0) target = $region17
    $region16: #{_lm_forward_padded.2} parent=1 // pred_region
      %s50 = ssub.s32 1024, 1024
      %51 = vsyncadd [#allocation9], %s50
      %s52 = sshll.u32 [#allocation8], 4
      %s53 = int_to_ptr.vmem [resolvable:$true] %s52
      %58 = dma.hbm_to_vmem [thread:$0]  %s3, 1024, %s53, [#allocation9], 64, 64, 4
    $region17: #{_lm_forward_padded.2} parent=1 // pred_fallthru
      _
    // Predicated region
    $region18: #{_lm_forward_padded.2} parent=1 // pred_check
      _
    $region19: #{_lm_forward_padded.2} parent=1 // pred_check_branch
      %60 = sbr.rel (0) target = $region21
    $region20: #{_lm_forward_padded.2} parent=1 // pred_region
      _
    $region21: #{_lm_forward_padded.2} parent=1 // pred_fallthru
      _
    // Predicated region
    $region22: #{_lm_forward_padded.2} parent=1 // pred_check
      _
    $region23: #{_lm_forward_padded.2} parent=1 // pred_check_branch
      %62 = sbr.rel (0) target = $region25
    $region24: #{_lm_forward_padded.2} parent=1 // pred_region
      %63 = dma.done [#allocation4], 128
    $region25: #{_lm_forward_padded.2} parent=1 // pred_fallthru
      _
    // Predicated region
    $region26: #{_lm_forward_padded.2} parent=1 // pred_check
      _
    $region27: #{_lm_forward_padded.2} parent=1 // pred_check_branch
      %65 = sbr.rel (0) target = $region29
    $region28: #{_lm_forward_padded.2} parent=1 // pred_region
      %66 = dma.done [#allocation6], 512
    $region29: #{_lm_forward_padded.2} parent=1 // pred_fallthru
      _
    // Predicated region
    $region30: #{_lm_forward_padded.2} parent=1 // pred_check
      _
    $region31: #{_lm_forward_padded.2} parent=1 // pred_check_branch
      %68 = sbr.rel (0) target = $region33
    $region32: #{_lm_forward_padded.2} parent=1 // pred_region
      %69 = dma.done [#allocation6], 1024
    $region33: #{_lm_forward_padded.2} parent=1 // pred_fallthru
      _
    // Predicated region
    $region34: #{_lm_forward_padded.2} parent=1 // pred_check
      _
    $region35: #{_lm_forward_padded.2} parent=1 // pred_check_branch
      %71 = sbr.rel (0) target = $region37
    $region36: #{_lm_forward_padded.2} parent=1 // pred_region
      %72 = dma.done [#allocation9], 1024
    $region37: #{_lm_forward_padded.2} parent=1 // pred_fallthru
      _
    %p74 = scmp.eq.s32.totalorder 0, 0
    // Predicated region
    $region38: #{_lm_forward_padded.2} parent=1 // pred_check
      %p75 = pneg %p74
    $region39: #{_lm_forward_padded.2} parent=1 // pred_check_branch
      %77 = sbr.rel (%p75) target = $region41
    $region40: #{_lm_forward_padded.2} parent=1 // pred_region
      %78 = vst [vmem:[#allocation2] sm:$0xff] 0.0
    $region41: #{_lm_forward_padded.2} parent=1 // pred_fallthru
      _
    %v79 = vld [vmem:[#allocation3] sm:$0xff]
    %v80 = vld [vmem:[#allocation5] sm:$0xf]
    %v81 = vld [vmem:[#allocation5 + $0x4] sm:$0xf]
    %v82 = vld [vmem:[#allocation5 + $0x8] sm:$0xf]
    %v83 = vld [vmem:[#allocation5 + $0xc] sm:$0xf]
    %v84 = vld [vmem:[#allocation5 + $0x10] sm:$0xf]
    %v85 = vld [vmem:[#allocation5 + $0x14] sm:$0xf]
    %v86 = vld [vmem:[#allocation5 + $0x18] sm:$0xf]
    %v87 = vld [vmem:[#allocation5 + $0x1c] sm:$0xf]
    %v88 = vld [vmem:[#allocation7] sm:$0xf]
    %v89 = vld [vmem:[#allocation7 + $0x4] sm:$0xf]
    %v90 = vld [vmem:[#allocation7 + $0x8] sm:$0xf]
    %v91 = vld [vmem:[#allocation7 + $0xc] sm:$0xf]
    %v92 = vld [vmem:[#allocation7 + $0x10] sm:$0xf]
    %v93 = vld [vmem:[#allocation7 + $0x14] sm:$0xf]
    %v94 = vld [vmem:[#allocation7 + $0x18] sm:$0xf]
    %v95 = vld [vmem:[#allocation7 + $0x1c] sm:$0xf]
    %v96 = vld [vmem:[#allocation7 + $0x20] sm:$0xf]
    %v97 = vld [vmem:[#allocation7 + $0x24] sm:$0xf]
    %v98 = vld [vmem:[#allocation7 + $0x28] sm:$0xf]
    %v99 = vld [vmem:[#allocation7 + $0x2c] sm:$0xf]
    %v100 = vld [vmem:[#allocation7 + $0x30] sm:$0xf]
    %v101 = vld [vmem:[#allocation7 + $0x34] sm:$0xf]
    %v102 = vld [vmem:[#allocation7 + $0x38] sm:$0xf]
    %v103 = vld [vmem:[#allocation7 + $0x3c] sm:$0xf]
    %v104 = vld [vmem:[%s4] sm:$0x1]
    %v106 = vlaneseq
    %v107 = vshrl.u32 %v106, 7
    %v108 = vsub.s32 0, %v107
    %v109 = vrot.slane %v104, %v108
    %v119 = vunpack.c.l.b16 %v80
    %v120 = vunpack.c.l.b16 %v81
    %v121 = vunpack.c.l.b16 %v82
    %v122 = vunpack.c.l.b16 %v83
    %v123 = vunpack.c.l.b16 %v84
    %v124 = vunpack.c.l.b16 %v85
    %v125 = vunpack.c.l.b16 %v86
    %v126 = vunpack.c.l.b16 %v87
    %v127 = vpack.c.b16 %v120, %v119
    %v128 = vpack.c.b16 %v122, %v121
    %v129 = vpack.c.b16 %v124, %v123
    %v130 = vpack.c.b16 %v126, %v125
    %v151 = vunpack.c.l.b16 %v88
    %v152 = vunpack.c.l.b16 %v89
    %v153 = vunpack.c.l.b16 %v90
    %v154 = vunpack.c.l.b16 %v91
    %v155 = vunpack.c.l.b16 %v92
    %v156 = vunpack.c.l.b16 %v93
    %v157 = vunpack.c.l.b16 %v94
    %v158 = vunpack.c.l.b16 %v95
    %v159 = vunpack.c.l.b16 %v96
    %v160 = vunpack.c.l.b16 %v97
    %v161 = vunpack.c.l.b16 %v98
    %v162 = vunpack.c.l.b16 %v99
    %v163 = vunpack.c.l.b16 %v100
    %v164 = vunpack.c.l.b16 %v101
    %v165 = vunpack.c.l.b16 %v102
    %v166 = vunpack.c.l.b16 %v103
    %v167 = vpack.c.b16 %v152, %v151
    %v168 = vpack.c.b16 %v154, %v153
    %v169 = vpack.c.b16 %v156, %v155
    %v170 = vpack.c.b16 %v158, %v157
    %v171 = vpack.c.b16 %v160, %v159
    %v172 = vpack.c.b16 %v162, %v161
    %v173 = vpack.c.b16 %v164, %v163
    %v174 = vpack.c.b16 %v166, %v165
    %183 = vmatprep.subr.bf16.mxu0 0
    %184 = vmatpush1.bf16.msra.mxu0 %v167
    %185 = vmatprep.subr.bf16.mxu0 0
    %186 = vmatpush1.bf16.msra.mxu0 %v168
    %187 = vmatprep.subr.bf16.mxu0 0
    %188 = vmatpush1.bf16.msra.mxu0 %v169
    %189 = vmatprep.subr.bf16.mxu0 0
    %190 = vmatpush1.bf16.msra.mxu0 %v170
    %191 = vmatprep.subr.bf16.mxu0 0
    %192 = vmatpush1.bf16.msra.mxu0 %v171
    %193 = vmatprep.subr.bf16.mxu0 0
    %194 = vmatpush1.bf16.msra.mxu0 %v172
    %195 = vmatprep.subr.bf16.mxu0 0
    %196 = vmatpush1.bf16.msra.mxu0 %v173
    %197 = vmatprep.subr.bf16.mxu0 0
    %198 = vmatpush1.bf16.msra.mxu0 %v174
    %199 = vmatprep.subr.bf16.mxu0 0
    %200 = vmatpush1.bf16.msra.mxu0 0
    %201 = vmatprep.subr.bf16.mxu0 0
    %202 = vmatpush1.bf16.msra.mxu0 0
    %203 = vmatprep.subr.bf16.mxu0 0
    %204 = vmatpush1.bf16.msra.mxu0 0
    %205 = vmatprep.subr.bf16.mxu0 0
    %206 = vmatpush1.bf16.msra.mxu0 0
    %207 = vmatprep.subr.bf16.mxu0 0
    %208 = vmatpush1.bf16.msra.mxu0 0
    %209 = vmatprep.subr.bf16.mxu0 0
    %210 = vmatpush1.bf16.msra.mxu0 0
    %211 = vmatprep.subr.bf16.mxu0 0
    %212 = vmatpush1.bf16.msra.mxu0 0
    %213 = vmatprep.subr.bf16.mxu0 0
    %214 = vmatpush1.bf16.msra.mxu0 0
    %215 = vmatprep.mubr.bf16.mxu0 0
    %216 = vmatmul.mubr.bf16.gmra.mrb[0].mxu0 %v127
    %v217 = vpop.f32.mrb[0].mxu0
    %v218 = vadd.f32 %v109, %v217
    %v219 = vpop.f32.mrb[0].mxu0
    %v220 = vpop.f32.mrb[0].mxu0
    %v221 = vadd.f32 %v109, %v220
    %v222 = vpop.f32.mrb[0].mxu0
    %223 = vmatprep.mubr.bf16.mxu0 0
    %224 = vmatmul.mubr.bf16.gmra.mrb[0].mxu0 %v128
    %v225 = vpop.f32.mrb[0].mxu0
    %v226 = vadd.f32 %v109, %v225
    %v227 = vpop.f32.mrb[0].mxu0
    %v228 = vpop.f32.mrb[0].mxu0
    %v229 = vadd.f32 %v109, %v228
    %v230 = vpop.f32.mrb[0].mxu0
    %231 = vmatprep.mubr.bf16.mxu0 0
    %232 = vmatmul.mubr.bf16.gmra.mrb[0].mxu0 %v129
    %v233 = vpop.f32.mrb[0].mxu0
    %v234 = vadd.f32 %v109, %v233
    %v235 = vpop.f32.mrb[0].mxu0
    %v236 = vpop.f32.mrb[0].mxu0
    %v237 = vadd.f32 %v109, %v236
    %v238 = vpop.f32.mrb[0].mxu0
    %239 = vmatprep.mubr.bf16.mxu0 0
    %240 = vmatmul.mubr.bf16.gmra.mrb[0].mxu0 %v130
    %v241 = vpop.f32.mrb[0].mxu0
    %v242 = vadd.f32 %v109, %v241
    %v243 = vpop.f32.mrb[0].mxu0
    %v244 = vpop.f32.mrb[0].mxu0
    %v245 = vadd.f32 %v109, %v244
    %v246 = vpop.f32.mrb[0].mxu0
    %247 = vdwg.mxu0
    %v248 = vld [vmem:[#allocation8] sm:$0xf]
    %v249 = vld [vmem:[#allocation8 + $0x4] sm:$0xf]
    %v250 = vld [vmem:[#allocation8 + $0x8] sm:$0xf]
    %v251 = vld [vmem:[#allocation8 + $0xc] sm:$0xf]
    %v252 = vld [vmem:[#allocation8 + $0x10] sm:$0xf]
    %v253 = vld [vmem:[#allocation8 + $0x14] sm:$0xf]
    %v254 = vld [vmem:[#allocation8 + $0x18] sm:$0xf]
    %v255 = vld [vmem:[#allocation8 + $0x1c] sm:$0xf]
    %v256 = vld [vmem:[#allocation8 + $0x20] sm:$0xf]
    %v257 = vld [vmem:[#allocation8 + $0x24] sm:$0xf]
    %v258 = vld [vmem:[#allocation8 + $0x28] sm:$0xf]
    %v259 = vld [vmem:[#allocation8 + $0x2c] sm:$0xf]
    %v260 = vld [vmem:[#allocation8 + $0x30] sm:$0xf]
    %v261 = vld [vmem:[#allocation8 + $0x34] sm:$0xf]
    %v262 = vld [vmem:[#allocation8 + $0x38] sm:$0xf]
    %v263 = vld [vmem:[#allocation8 + $0x3c] sm:$0xf]
    %v264 = vld [vmem:[#allocation2] sm:$0xff]
    %s265 = smul.u32 0, 8
    %v266 = vpack.c.bf16 %v264, %v264
    %v283 = vunpack.c.l.b16 %v248
    %v284 = vunpack.c.l.b16 %v249
    %v285 = vunpack.c.l.b16 %v250
    %v286 = vunpack.c.l.b16 %v251
    %v287 = vunpack.c.l.b16 %v252
    %v288 = vunpack.c.l.b16 %v253
    %v289 = vunpack.c.l.b16 %v254
    %v290 = vunpack.c.l.b16 %v255
    %v291 = vunpack.c.l.b16 %v256
    %v292 = vunpack.c.l.b16 %v257
    %v293 = vunpack.c.l.b16 %v258
    %v294 = vunpack.c.l.b16 %v259
    %v295 = vunpack.c.l.b16 %v260
    %v296 = vunpack.c.l.b16 %v261
    %v297 = vunpack.c.l.b16 %v262
    %v298 = vunpack.c.l.b16 %v263
    %v299 = vpack.c.b16 %v284, %v283
    %v300 = vpack.c.b16 %v286, %v285
    %v301 = vpack.c.b16 %v288, %v287
    %v302 = vpack.c.b16 %v290, %v289
    %v303 = vpack.c.b16 %v292, %v291
    %v304 = vpack.c.b16 %v294, %v293
    %v305 = vpack.c.b16 %v296, %v295
    %v306 = vpack.c.b16 %v298, %v297
    %315 = vmatprep.subr.bf16.mxu0 0
    %316 = vmatpush1.bf16.msra.mxu0 %v299
    %317 = vmatprep.subr.bf16.mxu0 0
    %318 = vmatpush1.bf16.msra.mxu0 %v300
    %319 = vmatprep.subr.bf16.mxu0 0
    %320 = vmatpush1.bf16.msra.mxu0 %v301
    %321 = vmatprep.subr.bf16.mxu0 0
    %322 = vmatpush1.bf16.msra.mxu0 %v302
    %323 = vmatprep.subr.bf16.mxu0 0
    %324 = vmatpush1.bf16.msra.mxu0 %v303
    %325 = vmatprep.subr.bf16.mxu0 0
    %326 = vmatpush1.bf16.msra.mxu0 %v304
    %327 = vmatprep.subr.bf16.mxu0 0
    %328 = vmatpush1.bf16.msra.mxu0 %v305
    %329 = vmatprep.subr.bf16.mxu0 0
    %330 = vmatpush1.bf16.msra.mxu0 %v306
    %331 = vmatprep.subr.bf16.mxu0 0
    %332 = vmatpush1.bf16.msra.mxu0 0
    %333 = vmatprep.subr.bf16.mxu0 0
    %334 = vmatpush1.bf16.msra.mxu0 0
    %335 = vmatprep.subr.bf16.mxu0 0
    %336 = vmatpush1.bf16.msra.mxu0 0
    %337 = vmatprep.subr.bf16.mxu0 0
    %338 = vmatpush1.bf16.msra.mxu0 0
    %339 = vmatprep.subr.bf16.mxu0 0
    %340 = vmatpush1.bf16.msra.mxu0 0
    %341 = vmatprep.subr.bf16.mxu0 0
    %342 = vmatpush1.bf16.msra.mxu0 0
    %343 = vmatprep.subr.bf16.mxu0 0
    %344 = vmatpush1.bf16.msra.mxu0 0
    %345 = vmatprep.subr.bf16.mxu0 0
    %346 = vmatpush1.bf16.msra.mxu0 0
    %347 = vmatprep.mubr.bf16.mxu0 0
    %348 = vmatmul.mubr.bf16.gmra.mrb[0].mxu0 %v266
    %v349 = vpop.f32.mrb[0].mxu0
    %v350 = vadd.f32 0.0, %v349
    %v351 = vpop.f32.mrb[0].mxu0
    %v352 = vpop.f32.mrb[0].mxu0
    %v353 = vpop.f32.mrb[0].mxu0
    %354 = vdwg.mxu0
    %v356 = vrot.slane %v350, 1
    %v357 = vrot.slane %v350, 2
    %v358 = vrot.slane %v350, 3
    %v359 = vrot.slane %v350, 4
    %v360 = vrot.slane %v350, 5
    %v361 = vrot.slane %v350, 6
    %v362 = vrot.slane %v350, 7
    %v371 = vadd.f32 %v218, %v350
    %v372 = vadd.f32 %v221, %v356
    %v373 = vadd.f32 %v226, %v357
    %v374 = vadd.f32 %v229, %v358
    %v375 = vadd.f32 %v234, %v359
    %v376 = vadd.f32 %v237, %v360
    %v377 = vadd.f32 %v242, %v361
    %v378 = vadd.f32 %v245, %v362
    %v379 = vtanh.pop %v371
    %v380 = vtanh.pop %v372
    %v381 = vtanh.pop %v373
    %v382 = vtanh.pop %v374
    %v383 = vtanh.pop %v375
    %v384 = vtanh.pop %v376
    %v385 = vtanh.pop %v377
    %v386 = vtanh.pop %v378
    %v387 = vstv %s265
    %vm388 = vcmp.lt.s32.totalorder %v387, %v79
    %v397 = vrot.slane %v380, 7
    %vm398 = vcmask 1041409
    %v399 = vsel %vm398, %v397, %v379
    %v400 = vrot.slane %v381, 6
    %vm401 = vcmask 1042434
    %v402 = vsel %vm401, %v400, %v399
    %v403 = vrot.slane %v382, 5
    %vm404 = vcmask 1043459
    %v405 = vsel %vm404, %v403, %v402
    %v406 = vrot.slane %v383, 4
    %vm407 = vcmask 1044484
    %v408 = vsel %vm407, %v406, %v405
    %v409 = vrot.slane %v384, 3
    %vm410 = vcmask 1045509
    %v411 = vsel %vm410, %v409, %v408
    %v412 = vrot.slane %v385, 2
    %vm413 = vcmask 1046534
    %v414 = vsel %vm413, %v412, %v411
    %v415 = vrot.slane %v386, 1
    %vm416 = vcmask 1047559
    %v417 = vsel %vm416, %v415, %v414
    %v419 = vsel %vm388, %v417, %v264
    %v420 = vsel %vm388, %v417, 0.0
    %v421 = vpack.c.bf16 %v419, %v419
    %422 = vmatprep.subr.bf16.mxu0 0
    %423 = vmatpush1.bf16.msra.mxu0 %v299
    %424 = vmatprep.subr.bf16.mxu0 0
    %425 = vmatpush1.bf16.msra.mxu0 %v300
    %426 = vmatprep.subr.bf16.mxu0 0
    %427 = vmatpush1.bf16.msra.mxu0 %v301
    %428 = vmatprep.subr.bf16.mxu0 0
    %429 = vmatpush1.bf16.msra.mxu0 %v302
    %430 = vmatprep.subr.bf16.mxu0 0
    %431 = vmatpush1.bf16.msra.mxu0 %v303
    %432 = vmatprep.subr.bf16.mxu0 0
    %433 = vmatpush1.bf16.msra.mxu0 %v304
    %434 = vmatprep.subr.bf16.mxu0 0
    %435 = vmatpush1.bf16.msra.mxu0 %v305
    %436 = vmatprep.subr.bf16.mxu0 0
    %437 = vmatpush1.bf16.msra.mxu0 %v306
    %438 = vmatprep.subr.bf16.mxu0 0
    %439 = vmatpush1.bf16.msra.mxu0 0
    %440 = vmatprep.subr.bf16.mxu0 0
    %441 = vmatpush1.bf16.msra.mxu0 0
    %442 = vmatprep.subr.bf16.mxu0 0
    %443 = vmatpush1.bf16.msra.mxu0 0
    %444 = vmatprep.subr.bf16.mxu0 0
    %445 = vmatpush1.bf16.msra.mxu0 0
    %446 = vmatprep.subr.bf16.mxu0 0
    %447 = vmatpush1.bf16.msra.mxu0 0
    %448 = vmatprep.subr.bf16.mxu0 0
    %449 = vmatpush1.bf16.msra.mxu0 0
    %450 = vmatprep.subr.bf16.mxu0 0
    %451 = vmatpush1.bf16.msra.mxu0 0
    %452 = vmatprep.subr.bf16.mxu0 0
    %453 = vmatpush1.bf16.msra.mxu0 0
    %454 = vmatprep.mubr.bf16.mxu0 0
    %455 = vmatmul.mubr.bf16.gmra.mrb[0].mxu0 %v421
    %v456 = vpop.f32.mrb[0].mxu0
    %v457 = vadd.f32 0.0, %v456
    %v458 = vpop.f32.mrb[0].mxu0
    %v459 = vpop.f32.mrb[0].mxu0
    %v460 = vpop.f32.mrb[0].mxu0
    %461 = vdwg.mxu0
    %v463 = vrot.slane %v457, 7
    %v464 = vrot.slane %v457, 1
    %v465 = vrot.slane %v457, 2
    %v466 = vrot.slane %v457, 3
    %v467 = vrot.slane %v457, 4
    %v468 = vrot.slane %v457, 5
    %v469 = vrot.slane %v457, 6
    %v478 = vadd.f32 %v218, %v463
    %v479 = vadd.f32 %v221, %v457
    %v480 = vadd.f32 %v226, %v464
    %v481 = vadd.f32 %v229, %v465
    %v482 = vadd.f32 %v234, %v466
    %v483 = vadd.f32 %v237, %v467
    %v484 = vadd.f32 %v242, %v468
    %v485 = vadd.f32 %v245, %v469
    %v486 = vtanh.pop %v478
    %v487 = vtanh.pop %v479
    %v488 = vtanh.pop %v480
    %v489 = vtanh.pop %v481
    %v490 = vtanh.pop %v482
    %v491 = vtanh.pop %v483
    %v492 = vtanh.pop %v484
    %v493 = vtanh.pop %v485
    %s494 = sadd.s32 %s265, 1
    %v495 = vstv %s494
    %vm496 = vcmp.lt.s32.totalorder %v495, %v79
    %v505 = vrot.slane %v486, 1
    %v506 = vsel %vm398, %v487, %v505
    %v507 = vrot.slane %v488, 7
    %v508 = vsel %vm401, %v507, %v506
    %v509 = vrot.slane %v489, 6
    %v510 = vsel %vm404, %v509, %v508
    %v511 = vrot.slane %v490, 5
    %v512 = vsel %vm407, %v511, %v510
    %v513 = vrot.slane %v491, 4
    %v514 = vsel %vm410, %v513, %v512
    %v515 = vrot.slane %v492, 3
    %v516 = vsel %vm413, %v515, %v514
    %v517 = vrot.slane %v493, 2
    %v518 = vsel %vm416, %v517, %v516
    %v520 = vsel %vm496, %v518, %v419
    %v521 = vsel %vm496, %v518, 0.0
    %v522 = vpack.c.bf16 %v520, %v520
    %523 = vmatprep.subr.bf16.mxu0 0
    %524 = vmatpush1.bf16.msra.mxu0 %v299
    %525 = vmatprep.subr.bf16.mxu0 0
    %526 = vmatpush1.bf16.msra.mxu0 %v300
    %527 = vmatprep.subr.bf16.mxu0 0
    %528 = vmatpush1.bf16.msra.mxu0 %v301
    %529 = vmatprep.subr.bf16.mxu0 0
    %530 = vmatpush1.bf16.msra.mxu0 %v302
    %531 = vmatprep.subr.bf16.mxu0 0
    %532 = vmatpush1.bf16.msra.mxu0 %v303
    %533 = vmatprep.subr.bf16.mxu0 0
    %534 = vmatpush1.bf16.msra.mxu0 %v304
    %535 = vmatprep.subr.bf16.mxu0 0
    %536 = vmatpush1.bf16.msra.mxu0 %v305
    %537 = vmatprep.subr.bf16.mxu0 0
    %538 = vmatpush1.bf16.msra.mxu0 %v306
    %539 = vmatprep.subr.bf16.mxu0 0
    %540 = vmatpush1.bf16.msra.mxu0 0
    %541 = vmatprep.subr.bf16.mxu0 0
    %542 = vmatpush1.bf16.msra.mxu0 0
    %543 = vmatprep.subr.bf16.mxu0 0
    %544 = vmatpush1.bf16.msra.mxu0 0
    %545 = vmatprep.subr.bf16.mxu0 0
    %546 = vmatpush1.bf16.msra.mxu0 0
    %547 = vmatprep.subr.bf16.mxu0 0
    %548 = vmatpush1.bf16.msra.mxu0 0
    %549 = vmatprep.subr.bf16.mxu0 0
    %550 = vmatpush1.bf16.msra.mxu0 0
    %551 = vmatprep.subr.bf16.mxu0 0
    %552 = vmatpush1.bf16.msra.mxu0 0
    %553 = vmatprep.subr.bf16.mxu0 0
    %554 = vmatpush1.bf16.msra.mxu0 0
    %555 = vmatprep.mubr.bf16.mxu0 0
    %556 = vmatmul.mubr.bf16.gmra.mrb[0].mxu0 %v522
    %v557 = vpop.f32.mrb[0].mxu0
    %v558 = vadd.f32 0.0, %v557
    %v559 = vpop.f32.mrb[0].mxu0
    %v560 = vpop.f32.mrb[0].mxu0
    %v561 = vpop.f32.mrb[0].mxu0
    %562 = vdwg.mxu0
    %v564 = vrot.slane %v558, 6
    %v565 = vrot.slane %v558, 7
    %v566 = vrot.slane %v558, 1
    %v567 = vrot.slane %v558, 2
    %v568 = vrot.slane %v558, 3
    %v569 = vrot.slane %v558, 4
    %v570 = vrot.slane %v558, 5
    %v579 = vadd.f32 %v218, %v564
    %v580 = vadd.f32 %v221, %v565
    %v581 = vadd.f32 %v226, %v558
    %v582 = vadd.f32 %v229, %v566
    %v583 = vadd.f32 %v234, %v567
    %v584 = vadd.f32 %v237, %v568
    %v585 = vadd.f32 %v242, %v569
    %v586 = vadd.f32 %v245, %v570
    %v587 = vtanh.pop %v579
    %v588 = vtanh.pop %v580
    %v589 = vtanh.pop %v581
    %v590 = vtanh.pop %v582
    %v591 = vtanh.pop %v583
    %v592 = vtanh.pop %v584
    %v593 = vtanh.pop %v585
    %v594 = vtanh.pop %v586
    %s595 = sadd.s32 %s265, 2
    %v596 = vstv %s595
    %vm597 = vcmp.lt.s32.totalorder %v596, %v79
    %v606 = vrot.slane %v587, 2
    %v607 = vrot.slane %v588, 1
    %v608 = vsel %vm398, %v607, %v606
    %v609 = vsel %vm401, %v589, %v608
    %v610 = vrot.slane %v590, 7
    %v611 = vsel %vm404, %v610, %v609
    %v612 = vrot.slane %v591, 6
    %v613 = vsel %vm407, %v612, %v611
    %v614 = vrot.slane %v592, 5
    %v615 = vsel %vm410, %v614, %v613
    %v616 = vrot.slane %v593, 4
    %v617 = vsel %vm413, %v616, %v615
    %v618 = vrot.slane %v594, 3
    %v619 = vsel %vm416, %v618, %v617
    %v621 = vsel %vm597, %v619, %v520
    %v622 = vsel %vm597, %v619, 0.0
    %v623 = vpack.c.bf16 %v621, %v621
    %624 = vmatprep.subr.bf16.mxu0 0
    %625 = vmatpush1.bf16.msra.mxu0 %v299
    %626 = vmatprep.subr.bf16.mxu0 0
    %627 = vmatpush1.bf16.msra.mxu0 %v300
    %628 = vmatprep.subr.bf16.mxu0 0
    %629 = vmatpush1.bf16.msra.mxu0 %v301
    %630 = vmatprep.subr.bf16.mxu0 0
    %631 = vmatpush1.bf16.msra.mxu0 %v302
    %632 = vmatprep.subr.bf16.mxu0 0
    %633 = vmatpush1.bf16.msra.mxu0 %v303
    %634 = vmatprep.subr.bf16.mxu0 0
    %635 = vmatpush1.bf16.msra.mxu0 %v304
    %636 = vmatprep.subr.bf16.mxu0 0
    %637 = vmatpush1.bf16.msra.mxu0 %v305
    %638 = vmatprep.subr.bf16.mxu0 0
    %639 = vmatpush1.bf16.msra.mxu0 %v306
    %640 = vmatprep.subr.bf16.mxu0 0
    %641 = vmatpush1.bf16.msra.mxu0 0
    %642 = vmatprep.subr.bf16.mxu0 0
    %643 = vmatpush1.bf16.msra.mxu0 0
    %644 = vmatprep.subr.bf16.mxu0 0
    %645 = vmatpush1.bf16.msra.mxu0 0
    %646 = vmatprep.subr.bf16.mxu0 0
    %647 = vmatpush1.bf16.msra.mxu0 0
    %648 = vmatprep.subr.bf16.mxu0 0
    %649 = vmatpush1.bf16.msra.mxu0 0
    %650 = vmatprep.subr.bf16.mxu0 0
    %651 = vmatpush1.bf16.msra.mxu0 0
    %652 = vmatprep.subr.bf16.mxu0 0
    %653 = vmatpush1.bf16.msra.mxu0 0
    %654 = vmatprep.subr.bf16.mxu0 0
    %655 = vmatpush1.bf16.msra.mxu0 0
    %656 = vmatprep.mubr.bf16.mxu0 0
    %657 = vmatmul.mubr.bf16.gmra.mrb[0].mxu0 %v623
    %v658 = vpop.f32.mrb[0].mxu0
    %v659 = vadd.f32 0.0, %v658
    %v660 = vpop.f32.mrb[0].mxu0
    %v661 = vpop.f32.mrb[0].mxu0
    %v662 = vpop.f32.mrb[0].mxu0
    %663 = vdwg.mxu0
    %v665 = vrot.slane %v659, 5
    %v666 = vrot.slane %v659, 6
    %v667 = vrot.slane %v659, 7
    %v668 = vrot.slane %v659, 1
    %v669 = vrot.slane %v659, 2
    %v670 = vrot.slane %v659, 3
    %v671 = vrot.slane %v659, 4
    %v680 = vadd.f32 %v218, %v665
    %v681 = vadd.f32 %v221, %v666
    %v682 = vadd.f32 %v226, %v667
    %v683 = vadd.f32 %v229, %v659
    %v684 = vadd.f32 %v234, %v668
    %v685 = vadd.f32 %v237, %v669
    %v686 = vadd.f32 %v242, %v670
    %v687 = vadd.f32 %v245, %v671
    %v688 = vtanh.pop %v680
    %v689 = vtanh.pop %v681
    %v690 = vtanh.pop %v682
    %v691 = vtanh.pop %v683
    %v692 = vtanh.pop %v684
    %v693 = vtanh.pop %v685
    %v694 = vtanh.pop %v686
    %v695 = vtanh.pop %v687
    %s696 = sadd.s32 %s265, 3
    %v697 = vstv %s696
    %vm698 = vcmp.lt.s32.totalorder %v697, %v79
    %v707 = vrot.slane %v688, 3
    %v708 = vrot.slane %v689, 2
    %v709 = vsel %vm398, %v708, %v707
    %v710 = vrot.slane %v690, 1
    %v711 = vsel %vm401, %v710, %v709
    %v712 = vsel %vm404, %v691, %v711
    %v713 = vrot.slane %v692, 7
    %v714 = vsel %vm407, %v713, %v712
    %v715 = vrot.slane %v693, 6
    %v716 = vsel %vm410, %v715, %v714
    %v717 = vrot.slane %v694, 5
    %v718 = vsel %vm413, %v717, %v716
    %v719 = vrot.slane %v695, 4
    %v720 = vsel %vm416, %v719, %v718
    %v722 = vsel %vm698, %v720, %v621
    %v723 = vsel %vm698, %v720, 0.0
    %v724 = vpack.c.bf16 %v722, %v722
    %725 = vmatprep.subr.bf16.mxu0 0
    %726 = vmatpush1.bf16.msra.mxu0 %v299
    %727 = vmatprep.subr.bf16.mxu0 0
    %728 = vmatpush1.bf16.msra.mxu0 %v300
    %729 = vmatprep.subr.bf16.mxu0 0
    %730 = vmatpush1.bf16.msra.mxu0 %v301
    %731 = vmatprep.subr.bf16.mxu0 0
    %732 = vmatpush1.bf16.msra.mxu0 %v302
    %733 = vmatprep.subr.bf16.mxu0 0
    %734 = vmatpush1.bf16.msra.mxu0 %v303
    %735 = vmatprep.subr.bf16.mxu0 0
    %736 = vmatpush1.bf16.msra.mxu0 %v304
    %737 = vmatprep.subr.bf16.mxu0 0
    %738 = vmatpush1.bf16.msra.mxu0 %v305
    %739 = vmatprep.subr.bf16.mxu0 0
    %740 = vmatpush1.bf16.msra.mxu0 %v306
    %741 = vmatprep.subr.bf16.mxu0 0
    %742 = vmatpush1.bf16.msra.mxu0 0
    %743 = vmatprep.subr.bf16.mxu0 0
    %744 = vmatpush1.bf16.msra.mxu0 0
    %745 = vmatprep.subr.bf16.mxu0 0
    %746 = vmatpush1.bf16.msra.mxu0 0
    %747 = vmatprep.subr.bf16.mxu0 0
    %748 = vmatpush1.bf16.msra.mxu0 0
    %749 = vmatprep.subr.bf16.mxu0 0
    %750 = vmatpush1.bf16.msra.mxu0 0
    %751 = vmatprep.subr.bf16.mxu0 0
    %752 = vmatpush1.bf16.msra.mxu0 0
    %753 = vmatprep.subr.bf16.mxu0 0
    %754 = vmatpush1.bf16.msra.mxu0 0
    %755 = vmatprep.subr.bf16.mxu0 0
    %756 = vmatpush1.bf16.msra.mxu0 0
    %757 = vmatprep.mubr.bf16.mxu0 0
    %758 = vmatmul.mubr.bf16.gmra.mrb[0].mxu0 %v724
    %v759 = vpop.f32.mrb[0].mxu0
    %v760 = vadd.f32 0.0, %v759
    %v761 = vpop.f32.mrb[0].mxu0
    %v762 = vpop.f32.mrb[0].mxu0
    %v763 = vpop.f32.mrb[0].mxu0
    %764 = vdwg.mxu0
    %v766 = vrot.slane %v760, 4
    %v767 = vrot.slane %v760, 5
    %v768 = vrot.slane %v760, 6
    %v769 = vrot.slane %v760, 7
    %v770 = vrot.slane %v760, 1
    %v771 = vrot.slane %v760, 2
    %v772 = vrot.slane %v760, 3
    %v781 = vadd.f32 %v218, %v766
    %v782 = vadd.f32 %v221, %v767
    %v783 = vadd.f32 %v226, %v768
    %v784 = vadd.f32 %v229, %v769
    %v785 = vadd.f32 %v234, %v760
    %v786 = vadd.f32 %v237, %v770
    %v787 = vadd.f32 %v242, %v771
    %v788 = vadd.f32 %v245, %v772
    %v789 = vtanh.pop %v781
    %v790 = vtanh.pop %v782
    %v791 = vtanh.pop %v783
    %v792 = vtanh.pop %v784
    %v793 = vtanh.pop %v785
    %v794 = vtanh.pop %v786
    %v795 = vtanh.pop %v787
    %v796 = vtanh.pop %v788
    %s797 = sadd.s32 %s265, 4
    %v798 = vstv %s797
    %vm799 = vcmp.lt.s32.totalorder %v798, %v79
    %v808 = vrot.slane %v789, 4
    %v809 = vrot.slane %v790, 3
    %v810 = vsel %vm398, %v809, %v808
    %v811 = vrot.slane %v791, 2
    %v812 = vsel %vm401, %v811, %v810
    %v813 = vrot.slane %v792, 1
    %v814 = vsel %vm404, %v813, %v812
    %v815 = vsel %vm407, %v793, %v814
    %v816 = vrot.slane %v794, 7
    %v817 = vsel %vm410, %v816, %v815
    %v818 = vrot.slane %v795, 6
    %v819 = vsel %vm413, %v818, %v817
    %v820 = vrot.slane %v796, 5
    %v821 = vsel %vm416, %v820, %v819
    %v823 = vsel %vm799, %v821, %v722
    %v824 = vsel %vm799, %v821, 0.0
    %v825 = vpack.c.bf16 %v823, %v823
    %826 = vmatprep.subr.bf16.mxu0 0
    %827 = vmatpush1.bf16.msra.mxu0 %v299
    %828 = vmatprep.subr.bf16.mxu0 0
    %829 = vmatpush1.bf16.msra.mxu0 %v300
    %830 = vmatprep.subr.bf16.mxu0 0
    %831 = vmatpush1.bf16.msra.mxu0 %v301
    %832 = vmatprep.subr.bf16.mxu0 0
    %833 = vmatpush1.bf16.msra.mxu0 %v302
    %834 = vmatprep.subr.bf16.mxu0 0
    %835 = vmatpush1.bf16.msra.mxu0 %v303
    %836 = vmatprep.subr.bf16.mxu0 0
    %837 = vmatpush1.bf16.msra.mxu0 %v304
    %838 = vmatprep.subr.bf16.mxu0 0
    %839 = vmatpush1.bf16.msra.mxu0 %v305
    %840 = vmatprep.subr.bf16.mxu0 0
    %841 = vmatpush1.bf16.msra.mxu0 %v306
    %842 = vmatprep.subr.bf16.mxu0 0
    %843 = vmatpush1.bf16.msra.mxu0 0
    %844 = vmatprep.subr.bf16.mxu0 0
    %845 = vmatpush1.bf16.msra.mxu0 0
    %846 = vmatprep.subr.bf16.mxu0 0
    %847 = vmatpush1.bf16.msra.mxu0 0
    %848 = vmatprep.subr.bf16.mxu0 0
    %849 = vmatpush1.bf16.msra.mxu0 0
    %850 = vmatprep.subr.bf16.mxu0 0
    %851 = vmatpush1.bf16.msra.mxu0 0
    %852 = vmatprep.subr.bf16.mxu0 0
    %853 = vmatpush1.bf16.msra.mxu0 0
    %854 = vmatprep.subr.bf16.mxu0 0
    %855 = vmatpush1.bf16.msra.mxu0 0
    %856 = vmatprep.subr.bf16.mxu0 0
    %857 = vmatpush1.bf16.msra.mxu0 0
    %858 = vmatprep.mubr.bf16.mxu0 0
    %859 = vmatmul.mubr.bf16.gmra.mrb[0].mxu0 %v825
    %v860 = vpop.f32.mrb[0].mxu0
    %v861 = vadd.f32 0.0, %v860
    %v862 = vpop.f32.mrb[0].mxu0
    %v863 = vpop.f32.mrb[0].mxu0
    %v864 = vpop.f32.mrb[0].mxu0
    %865 = vdwg.mxu0
    %v867 = vrot.slane %v861, 3
    %v868 = vrot.slane %v861, 4
    %v869 = vrot.slane %v861, 5
    %v870 = vrot.slane %v861, 6
    %v871 = vrot.slane %v861, 7
    %v872 = vrot.slane %v861, 1
    %v873 = vrot.slane %v861, 2
    %v882 = vadd.f32 %v218, %v867
    %v883 = vadd.f32 %v221, %v868
    %v884 = vadd.f32 %v226, %v869
    %v885 = vadd.f32 %v229, %v870
    %v886 = vadd.f32 %v234, %v871
    %v887 = vadd.f32 %v237, %v861
    %v888 = vadd.f32 %v242, %v872
    %v889 = vadd.f32 %v245, %v873
    %v890 = vtanh.pop %v882
    %v891 = vtanh.pop %v883
    %v892 = vtanh.pop %v884
    %v893 = vtanh.pop %v885
    %v894 = vtanh.pop %v886
    %v895 = vtanh.pop %v887
    %v896 = vtanh.pop %v888
    %v897 = vtanh.pop %v889
    %s898 = sadd.s32 %s265, 5
    %v899 = vstv %s898
    %vm900 = vcmp.lt.s32.totalorder %v899, %v79
    %v909 = vrot.slane %v890, 5
    %v910 = vrot.slane %v891, 4
    %v911 = vsel %vm398, %v910, %v909
    %v912 = vrot.slane %v892, 3
    %v913 = vsel %vm401, %v912, %v911
    %v914 = vrot.slane %v893, 2
    %v915 = vsel %vm404, %v914, %v913
    %v916 = vrot.slane %v894, 1
    %v917 = vsel %vm407, %v916, %v915
    %v918 = vsel %vm410, %v895, %v917
    %v919 = vrot.slane %v896, 7
    %v920 = vsel %vm413, %v919, %v918
    %v921 = vrot.slane %v897, 6
    %v922 = vsel %vm416, %v921, %v920
    %v924 = vsel %vm900, %v922, %v823
    %v925 = vsel %vm900, %v922, 0.0
    %v926 = vpack.c.bf16 %v924, %v924
    %927 = vmatprep.subr.bf16.mxu0 0
    %928 = vmatpush1.bf16.msra.mxu0 %v299
    %929 = vmatprep.subr.bf16.mxu0 0
    %930 = vmatpush1.bf16.msra.mxu0 %v300
    %931 = vmatprep.subr.bf16.mxu0 0
    %932 = vmatpush1.bf16.msra.mxu0 %v301
    %933 = vmatprep.subr.bf16.mxu0 0
    %934 = vmatpush1.bf16.msra.mxu0 %v302
    %935 = vmatprep.subr.bf16.mxu0 0
    %936 = vmatpush1.bf16.msra.mxu0 %v303
    %937 = vmatprep.subr.bf16.mxu0 0
    %938 = vmatpush1.bf16.msra.mxu0 %v304
    %939 = vmatprep.subr.bf16.mxu0 0
    %940 = vmatpush1.bf16.msra.mxu0 %v305
    %941 = vmatprep.subr.bf16.mxu0 0
    %942 = vmatpush1.bf16.msra.mxu0 %v306
    %943 = vmatprep.subr.bf16.mxu0 0
    %944 = vmatpush1.bf16.msra.mxu0 0
    %945 = vmatprep.subr.bf16.mxu0 0
    %946 = vmatpush1.bf16.msra.mxu0 0
    %947 = vmatprep.subr.bf16.mxu0 0
    %948 = vmatpush1.bf16.msra.mxu0 0
    %949 = vmatprep.subr.bf16.mxu0 0
    %950 = vmatpush1.bf16.msra.mxu0 0
    %951 = vmatprep.subr.bf16.mxu0 0
    %952 = vmatpush1.bf16.msra.mxu0 0
    %953 = vmatprep.subr.bf16.mxu0 0
    %954 = vmatpush1.bf16.msra.mxu0 0
    %955 = vmatprep.subr.bf16.mxu0 0
    %956 = vmatpush1.bf16.msra.mxu0 0
    %957 = vmatprep.subr.bf16.mxu0 0
    %958 = vmatpush1.bf16.msra.mxu0 0
    %959 = vmatprep.mubr.bf16.mxu0 0
    %960 = vmatmul.mubr.bf16.gmra.mrb[0].mxu0 %v926
    %v961 = vpop.f32.mrb[0].mxu0
    %v962 = vadd.f32 0.0, %v961
    %v963 = vpop.f32.mrb[0].mxu0
    %v964 = vpop.f32.mrb[0].mxu0
    %v965 = vpop.f32.mrb[0].mxu0
    %966 = vdwg.mxu0
    %v968 = vrot.slane %v962, 2
    %v969 = vrot.slane %v962, 3
    %v970 = vrot.slane %v962, 4
    %v971 = vrot.slane %v962, 5
    %v972 = vrot.slane %v962, 6
    %v973 = vrot.slane %v962, 7
    %v974 = vrot.slane %v962, 1
    %v983 = vadd.f32 %v218, %v968
    %v984 = vadd.f32 %v221, %v969
    %v985 = vadd.f32 %v226, %v970
    %v986 = vadd.f32 %v229, %v971
    %v987 = vadd.f32 %v234, %v972
    %v988 = vadd.f32 %v237, %v973
    %v989 = vadd.f32 %v242, %v962
    %v990 = vadd.f32 %v245, %v974
    %v991 = vtanh.pop %v983
    %v992 = vtanh.pop %v984
    %v993 = vtanh.pop %v985
    %v994 = vtanh.pop %v986
    %v995 = vtanh.pop %v987
    %v996 = vtanh.pop %v988
    %v997 = vtanh.pop %v989
    %v998 = vtanh.pop %v990
    %s999 = sadd.s32 %s265, 6
    %v1000 = vstv %s999
    %vm1001 = vcmp.lt.s32.totalorder %v1000, %v79
    %v1010 = vrot.slane %v991, 6
    %v1011 = vrot.slane %v992, 5
    %v1012 = vsel %vm398, %v1011, %v1010
    %v1013 = vrot.slane %v993, 4
    %v1014 = vsel %vm401, %v1013, %v1012
    %v1015 = vrot.slane %v994, 3
    %v1016 = vsel %vm404, %v1015, %v1014
    %v1017 = vrot.slane %v995, 2
    %v1018 = vsel %vm407, %v1017, %v1016
    %v1019 = vrot.slane %v996, 1
    %v1020 = vsel %vm410, %v1019, %v1018
    %v1021 = vsel %vm413, %v997, %v1020
    %v1022 = vrot.slane %v998, 7
    %v1023 = vsel %vm416, %v1022, %v1021
    %v1025 = vsel %vm1001, %v1023, %v924
    %v1026 = vsel %vm1001, %v1023, 0.0
    %v1027 = vpack.c.bf16 %v1025, %v1025
    %1028 = vmatprep.subr.bf16.mxu0 0
    %1029 = vmatpush1.bf16.msra.mxu0 %v299
    %1030 = vmatprep.subr.bf16.mxu0 0
    %1031 = vmatpush1.bf16.msra.mxu0 %v300
    %1032 = vmatprep.subr.bf16.mxu0 0
    %1033 = vmatpush1.bf16.msra.mxu0 %v301
    %1034 = vmatprep.subr.bf16.mxu0 0
    %1035 = vmatpush1.bf16.msra.mxu0 %v302
    %1036 = vmatprep.subr.bf16.mxu0 0
    %1037 = vmatpush1.bf16.msra.mxu0 %v303
    %1038 = vmatprep.subr.bf16.mxu0 0
    %1039 = vmatpush1.bf16.msra.mxu0 %v304
    %1040 = vmatprep.subr.bf16.mxu0 0
    %1041 = vmatpush1.bf16.msra.mxu0 %v305
    %1042 = vmatprep.subr.bf16.mxu0 0
    %1043 = vmatpush1.bf16.msra.mxu0 %v306
    %1044 = vmatprep.subr.bf16.mxu0 0
    %1045 = vmatpush1.bf16.msra.mxu0 0
    %1046 = vmatprep.subr.bf16.mxu0 0
    %1047 = vmatpush1.bf16.msra.mxu0 0
    %1048 = vmatprep.subr.bf16.mxu0 0
    %1049 = vmatpush1.bf16.msra.mxu0 0
    %1050 = vmatprep.subr.bf16.mxu0 0
    %1051 = vmatpush1.bf16.msra.mxu0 0
    %1052 = vmatprep.subr.bf16.mxu0 0
    %1053 = vmatpush1.bf16.msra.mxu0 0
    %1054 = vmatprep.subr.bf16.mxu0 0
    %1055 = vmatpush1.bf16.msra.mxu0 0
    %1056 = vmatprep.subr.bf16.mxu0 0
    %1057 = vmatpush1.bf16.msra.mxu0 0
    %1058 = vmatprep.subr.bf16.mxu0 0
    %1059 = vmatpush1.bf16.msra.mxu0 0
    %1060 = vmatprep.mubr.bf16.mxu0 0
    %1061 = vmatmul.mubr.bf16.gmra.mrb[0].mxu0 %v1027
    %v1062 = vpop.f32.mrb[0].mxu0
    %v1063 = vadd.f32 0.0, %v1062
    %v1064 = vpop.f32.mrb[0].mxu0
    %v1065 = vpop.f32.mrb[0].mxu0
    %v1066 = vpop.f32.mrb[0].mxu0
    %1067 = vdwg.mxu0
    %v1069 = vrot.slane %v1063, 1
    %v1070 = vrot.slane %v1063, 2
    %v1071 = vrot.slane %v1063, 3
    %v1072 = vrot.slane %v1063, 4
    %v1073 = vrot.slane %v1063, 5
    %v1074 = vrot.slane %v1063, 6
    %v1075 = vrot.slane %v1063, 7
    %v1084 = vadd.f32 %v218, %v1069
    %v1085 = vadd.f32 %v221, %v1070
    %v1086 = vadd.f32 %v226, %v1071
    %v1087 = vadd.f32 %v229, %v1072
    %v1088 = vadd.f32 %v234, %v1073
    %v1089 = vadd.f32 %v237, %v1074
    %v1090 = vadd.f32 %v242, %v1075
    %v1091 = vadd.f32 %v245, %v1063
    %v1092 = vtanh.pop %v1084
    %v1093 = vtanh.pop %v1085
    %v1094 = vtanh.pop %v1086
    %v1095 = vtanh.pop %v1087
    %v1096 = vtanh.pop %v1088
    %v1097 = vtanh.pop %v1089
    %v1098 = vtanh.pop %v1090
    %v1099 = vtanh.pop %v1091
    %s1100 = sadd.s32 %s265, 7
    %v1101 = vstv %s1100
    %vm1102 = vcmp.lt.s32.totalorder %v1101, %v79
    %v1111 = vrot.slane %v1092, 7
    %v1112 = vrot.slane %v1093, 6
    %v1113 = vsel %vm398, %v1112, %v1111
    %v1114 = vrot.slane %v1094, 5
    %v1115 = vsel %vm401, %v1114, %v1113
    %v1116 = vrot.slane %v1095, 4
    %v1117 = vsel %vm404, %v1116, %v1115
    %v1118 = vrot.slane %v1096, 3
    %v1119 = vsel %vm407, %v1118, %v1117
    %v1120 = vrot.slane %v1097, 2
    %v1121 = vsel %vm410, %v1120, %v1119
    %v1122 = vrot.slane %v1098, 1
    %v1123 = vsel %vm413, %v1122, %v1121
    %v1124 = vsel %vm416, %v1099, %v1123
    %v1126 = vsel %vm1102, %v1124, %v1025
    %v1127 = vsel %vm1102, %v1124, 0.0
    %1128 = vst [vmem:[#allocation2] sm:$0xff] %v1126
    %v1130 = vcombine.high %v420, %v420
    %v1132 = vunpack.c.l.s4 1966171168
    %v1133 = vunpack.c.0.s8 %v1132
    %v1134 = vlaneseq
    %v1135 = vshrl.u32 %v1134, 7
    %v1136 = vsub.s32 %v1133, %v1135
    %v1137 = vrot.slane %v420, %v1136
    %v1139 = vunpack.c.l.s4 1966171168
    %v1140 = vunpack.c.0.s8 %v1139
    %v1141 = vlaneseq
    %v1142 = vshrl.u32 %v1141, 7
    %v1143 = vsub.s32 %v1140, %v1142
    %v1144 = vrot.slane %v1130, %v1143
    %v1145 = vcombine.high %v1137, %v1137
    %v1146 = vcombine.high %v1144, %v1144
    %v1148 = vunpack.c.l.s4 1966171168
    %v1149 = vunpack.c.0.s8 %v1148
    %v1150 = vlaneseq
    %v1151 = vshrl.u32 %v1150, 7
    %v1152 = vsub.s32 %v1149, %v1151
    %v1153 = vrot.slane %v1137, %v1152
    %v1155 = vunpack.c.l.s4 1966171168
    %v1156 = vunpack.c.0.s8 %v1155
    %v1157 = vlaneseq
    %v1158 = vshrl.u32 %v1157, 7
    %v1159 = vsub.s32 %v1156, %v1158
    %v1160 = vrot.slane %v1144, %v1159
    %v1162 = vunpack.c.l.s4 1966171168
    %v1163 = vunpack.c.0.s8 %v1162
    %v1164 = vlaneseq
    %v1165 = vshrl.u32 %v1164, 7
    %v1166 = vsub.s32 %v1163, %v1165
    %v1167 = vrot.slane %v1145, %v1166
    %v1169 = vunpack.c.l.s4 1966171168
    %v1170 = vunpack.c.0.s8 %v1169
    %v1171 = vlaneseq
    %v1172 = vshrl.u32 %v1171, 7
    %v1173 = vsub.s32 %v1170, %v1172
    %v1174 = vrot.slane %v1146, %v1173
    %v1175 = vcombine.high %v1153, %v1153
    %v1176 = vcombine.high %v1160, %v1160
    %v1177 = vcombine.high %v1167, %v1167
    %v1178 = vcombine.high %v1174, %v1174
    %v1188 = vcombine.high %v521, %v521
    %v1190 = vunpack.c.l.s4 1966171168
    %v1191 = vunpack.c.0.s8 %v1190
    %v1192 = vlaneseq
    %v1193 = vshrl.u32 %v1192, 7
    %v1194 = vsub.s32 %v1191, %v1193
    %v1195 = vrot.slane %v521, %v1194
    %v1197 = vunpack.c.l.s4 1966171168
    %v1198 = vunpack.c.0.s8 %v1197
    %v1199 = vlaneseq
    %v1200 = vshrl.u32 %v1199, 7
    %v1201 = vsub.s32 %v1198, %v1200
    %v1202 = vrot.slane %v1188, %v1201
    %v1203 = vcombine.high %v1195, %v1195
    %v1204 = vcombine.high %v1202, %v1202
    %v1206 = vunpack.c.l.s4 1966171168
    %v1207 = vunpack.c.0.s8 %v1206
    %v1208 = vlaneseq
    %v1209 = vshrl.u32 %v1208, 7
    %v1210 = vsub.s32 %v1207, %v1209
    %v1211 = vrot.slane %v1195, %v1210
    %v1213 = vunpack.c.l.s4 1966171168
    %v1214 = vunpack.c.0.s8 %v1213
    %v1215 = vlaneseq
    %v1216 = vshrl.u32 %v1215, 7
    %v1217 = vsub.s32 %v1214, %v1216
    %v1218 = vrot.slane %v1202, %v1217
    %v1220 = vunpack.c.l.s4 1966171168
    %v1221 = vunpack.c.0.s8 %v1220
    %v1222 = vlaneseq
    %v1223 = vshrl.u32 %v1222, 7
    %v1224 = vsub.s32 %v1221, %v1223
    %v1225 = vrot.slane %v1203, %v1224
    %v1227 = vunpack.c.l.s4 1966171168
    %v1228 = vunpack.c.0.s8 %v1227
    %v1229 = vlaneseq
    %v1230 = vshrl.u32 %v1229, 7
    %v1231 = vsub.s32 %v1228, %v1230
    %v1232 = vrot.slane %v1204, %v1231
    %v1233 = vcombine.high %v1211, %v1211
    %v1234 = vcombine.high %v1218, %v1218
    %v1235 = vcombine.high %v1225, %v1225
    %v1236 = vcombine.high %v1232, %v1232
    %v1238 = vcombine.high %v622, %v622
    %v1240 = vunpack.c.l.s4 1966171168
    %v1241 = vunpack.c.0.s8 %v1240
    %v1242 = vlaneseq
    %v1243 = vshrl.u32 %v1242, 7
    %v1244 = vsub.s32 %v1241, %v1243
    %v1245 = vrot.slane %v622, %v1244
    %v1247 = vunpack.c.l.s4 1966171168
    %v1248 = vunpack.c.0.s8 %v1247
    %v1249 = vlaneseq
    %v1250 = vshrl.u32 %v1249, 7
    %v1251 = vsub.s32 %v1248, %v1250
    %v1252 = vrot.slane %v1238, %v1251
    %v1253 = vcombine.high %v1245, %v1245
    %v1254 = vcombine.high %v1252, %v1252
    %v1256 = vunpack.c.l.s4 1966171168
    %v1257 = vunpack.c.0.s8 %v1256
    %v1258 = vlaneseq
    %v1259 = vshrl.u32 %v1258, 7
    %v1260 = vsub.s32 %v1257, %v1259
    %v1261 = vrot.slane %v1245, %v1260
    %v1263 = vunpack.c.l.s4 1966171168
    %v1264 = vunpack.c.0.s8 %v1263
    %v1265 = vlaneseq
    %v1266 = vshrl.u32 %v1265, 7
    %v1267 = vsub.s32 %v1264, %v1266
    %v1268 = vrot.slane %v1252, %v1267
    %v1270 = vunpack.c.l.s4 1966171168
    %v1271 = vunpack.c.0.s8 %v1270
    %v1272 = vlaneseq
    %v1273 = vshrl.u32 %v1272, 7
    %v1274 = vsub.s32 %v1271, %v1273
    %v1275 = vrot.slane %v1253, %v1274
    %v1277 = vunpack.c.l.s4 1966171168
    %v1278 = vunpack.c.0.s8 %v1277
    %v1279 = vlaneseq
    %v1280 = vshrl.u32 %v1279, 7
    %v1281 = vsub.s32 %v1278, %v1280
    %v1282 = vrot.slane %v1254, %v1281
    %v1283 = vcombine.high %v1261, %v1261
    %v1284 = vcombine.high %v1268, %v1268
    %v1285 = vcombine.high %v1275, %v1275
    %v1286 = vcombine.high %v1282, %v1282
    %v1288 = vcombine.high %v723, %v723
    %v1290 = vunpack.c.l.s4 1966171168
    %v1291 = vunpack.c.0.s8 %v1290
    %v1292 = vlaneseq
    %v1293 = vshrl.u32 %v1292, 7
    %v1294 = vsub.s32 %v1291, %v1293
    %v1295 = vrot.slane %v723, %v1294
    %v1297 = vunpack.c.l.s4 1966171168
    %v1298 = vunpack.c.0.s8 %v1297
    %v1299 = vlaneseq
    %v1300 = vshrl.u32 %v1299, 7
    %v1301 = vsub.s32 %v1298, %v1300
    %v1302 = vrot.slane %v1288, %v1301
    %v1303 = vcombine.high %v1295, %v1295
    %v1304 = vcombine.high %v1302, %v1302
    %v1306 = vunpack.c.l.s4 1966171168
    %v1307 = vunpack.c.0.s8 %v1306
    %v1308 = vlaneseq
    %v1309 = vshrl.u32 %v1308, 7
    %v1310 = vsub.s32 %v1307, %v1309
    %v1311 = vrot.slane %v1295, %v1310
    %v1313 = vunpack.c.l.s4 1966171168
    %v1314 = vunpack.c.0.s8 %v1313
    %v1315 = vlaneseq
    %v1316 = vshrl.u32 %v1315, 7
    %v1317 = vsub.s32 %v1314, %v1316
    %v1318 = vrot.slane %v1302, %v1317
    %v1320 = vunpack.c.l.s4 1966171168
    %v1321 = vunpack.c.0.s8 %v1320
    %v1322 = vlaneseq
    %v1323 = vshrl.u32 %v1322, 7
    %v1324 = vsub.s32 %v1321, %v1323
    %v1325 = vrot.slane %v1303, %v1324
    %v1327 = vunpack.c.l.s4 1966171168
    %v1328 = vunpack.c.0.s8 %v1327
    %v1329 = vlaneseq
    %v1330 = vshrl.u32 %v1329, 7
    %v1331 = vsub.s32 %v1328, %v1330
    %v1332 = vrot.slane %v1304, %v1331
    %v1333 = vcombine.high %v1311, %v1311
    %v1334 = vcombine.high %v1318, %v1318
    %v1335 = vcombine.high %v1325, %v1325
    %v1336 = vcombine.high %v1332, %v1332
    %v1338 = vcombine.high %v824, %v824
    %v1340 = vunpack.c.l.s4 1966171168
    %v1341 = vunpack.c.0.s8 %v1340
    %v1342 = vlaneseq
    %v1343 = vshrl.u32 %v1342, 7
    %v1344 = vsub.s32 %v1341, %v1343
    %v1345 = vrot.slane %v824, %v1344
    %v1347 = vunpack.c.l.s4 1966171168
    %v1348 = vunpack.c.0.s8 %v1347
    %v1349 = vlaneseq
    %v1350 = vshrl.u32 %v1349, 7
    %v1351 = vsub.s32 %v1348, %v1350
    %v1352 = vrot.slane %v1338, %v1351
    %v1353 = vcombine.high %v1345, %v1345
    %v1354 = vcombine.high %v1352, %v1352
    %v1356 = vunpack.c.l.s4 1966171168
    %v1357 = vunpack.c.0.s8 %v1356
    %v1358 = vlaneseq
    %v1359 = vshrl.u32 %v1358, 7
    %v1360 = vsub.s32 %v1357, %v1359
    %v1361 = vrot.slane %v1345, %v1360
    %v1363 = vunpack.c.l.s4 1966171168
    %v1364 = vunpack.c.0.s8 %v1363
    %v1365 = vlaneseq
    %v1366 = vshrl.u32 %v1365, 7
    %v1367 = vsub.s32 %v1364, %v1366
    %v1368 = vrot.slane %v1352, %v1367
    %v1370 = vunpack.c.l.s4 1966171168
    %v1371 = vunpack.c.0.s8 %v1370
    %v1372 = vlaneseq
    %v1373 = vshrl.u32 %v1372, 7
    %v1374 = vsub.s32 %v1371, %v1373
    %v1375 = vrot.slane %v1353, %v1374
    %v1377 = vunpack.c.l.s4 1966171168
    %v1378 = vunpack.c.0.s8 %v1377
    %v1379 = vlaneseq
    %v1380 = vshrl.u32 %v1379, 7
    %v1381 = vsub.s32 %v1378, %v1380
    %v1382 = vrot.slane %v1354, %v1381
    %v1383 = vcombine.high %v1361, %v1361
    %v1384 = vcombine.high %v1368, %v1368
    %v1385 = vcombine.high %v1375, %v1375
    %v1386 = vcombine.high %v1382, %v1382
    %v1388 = vcombine.high %v925, %v925
    %v1390 = vunpack.c.l.s4 1966171168
    %v1391 = vunpack.c.0.s8 %v1390
    %v1392 = vlaneseq
    %v1393 = vshrl.u32 %v1392, 7
    %v1394 = vsub.s32 %v1391, %v1393
    %v1395 = vrot.slane %v925, %v1394
    %v1397 = vunpack.c.l.s4 1966171168
    %v1398 = vunpack.c.0.s8 %v1397
    %v1399 = vlaneseq
    %v1400 = vshrl.u32 %v1399, 7
    %v1401 = vsub.s32 %v1398, %v1400
    %v1402 = vrot.slane %v1388, %v1401
    %v1403 = vcombine.high %v1395, %v1395
    %v1404 = vcombine.high %v1402, %v1402
    %v1406 = vunpack.c.l.s4 1966171168
    %v1407 = vunpack.c.0.s8 %v1406
    %v1408 = vlaneseq
    %v1409 = vshrl.u32 %v1408, 7
    %v1410 = vsub.s32 %v1407, %v1409
    %v1411 = vrot.slane %v1395, %v1410
    %v1413 = vunpack.c.l.s4 1966171168
    %v1414 = vunpack.c.0.s8 %v1413
    %v1415 = vlaneseq
    %v1416 = vshrl.u32 %v1415, 7
    %v1417 = vsub.s32 %v1414, %v1416
    %v1418 = vrot.slane %v1402, %v1417
    %v1420 = vunpack.c.l.s4 1966171168
    %v1421 = vunpack.c.0.s8 %v1420
    %v1422 = vlaneseq
    %v1423 = vshrl.u32 %v1422, 7
    %v1424 = vsub.s32 %v1421, %v1423
    %v1425 = vrot.slane %v1403, %v1424
    %v1427 = vunpack.c.l.s4 1966171168
    %v1428 = vunpack.c.0.s8 %v1427
    %v1429 = vlaneseq
    %v1430 = vshrl.u32 %v1429, 7
    %v1431 = vsub.s32 %v1428, %v1430
    %v1432 = vrot.slane %v1404, %v1431
    %v1433 = vcombine.high %v1411, %v1411
    %v1434 = vcombine.high %v1418, %v1418
    %v1435 = vcombine.high %v1425, %v1425
    %v1436 = vcombine.high %v1432, %v1432
    %v1438 = vcombine.high %v1026, %v1026
    %v1440 = vunpack.c.l.s4 1966171168
    %v1441 = vunpack.c.0.s8 %v1440
    %v1442 = vlaneseq
    %v1443 = vshrl.u32 %v1442, 7
    %v1444 = vsub.s32 %v1441, %v1443
    %v1445 = vrot.slane %v1026, %v1444
    %v1447 = vunpack.c.l.s4 1966171168
    %v1448 = vunpack.c.0.s8 %v1447
    %v1449 = vlaneseq
    %v1450 = vshrl.u32 %v1449, 7
    %v1451 = vsub.s32 %v1448, %v1450
    %v1452 = vrot.slane %v1438, %v1451
    %v1453 = vcombine.high %v1445, %v1445
    %v1454 = vcombine.high %v1452, %v1452
    %v1456 = vunpack.c.l.s4 1966171168
    %v1457 = vunpack.c.0.s8 %v1456
    %v1458 = vlaneseq
    %v1459 = vshrl.u32 %v1458, 7
    %v1460 = vsub.s32 %v1457, %v1459
    %v1461 = vrot.slane %v1445, %v1460
    %v1463 = vunpack.c.l.s4 1966171168
    %v1464 = vunpack.c.0.s8 %v1463
    %v1465 = vlaneseq
    %v1466 = vshrl.u32 %v1465, 7
    %v1467 = vsub.s32 %v1464, %v1466
    %v1468 = vrot.slane %v1452, %v1467
    %v1470 = vunpack.c.l.s4 1966171168
    %v1471 = vunpack.c.0.s8 %v1470
    %v1472 = vlaneseq
    %v1473 = vshrl.u32 %v1472, 7
    %v1474 = vsub.s32 %v1471, %v1473
    %v1475 = vrot.slane %v1453, %v1474
    %v1477 = vunpack.c.l.s4 1966171168
    %v1478 = vunpack.c.0.s8 %v1477
    %v1479 = vlaneseq
    %v1480 = vshrl.u32 %v1479, 7
    %v1481 = vsub.s32 %v1478, %v1480
    %v1482 = vrot.slane %v1454, %v1481
    %v1483 = vcombine.high %v1461, %v1461
    %v1484 = vcombine.high %v1468, %v1468
    %v1485 = vcombine.high %v1475, %v1475
    %v1486 = vcombine.high %v1482, %v1482
    %v1488 = vcombine.high %v1127, %v1127
    %v1490 = vunpack.c.l.s4 1966171168
    %v1491 = vunpack.c.0.s8 %v1490
    %v1492 = vlaneseq
    %v1493 = vshrl.u32 %v1492, 7
    %v1494 = vsub.s32 %v1491, %v1493
    %v1495 = vrot.slane %v1127, %v1494
    %v1497 = vunpack.c.l.s4 1966171168
    %v1498 = vunpack.c.0.s8 %v1497
    %v1499 = vlaneseq
    %v1500 = vshrl.u32 %v1499, 7
    %v1501 = vsub.s32 %v1498, %v1500
    %v1502 = vrot.slane %v1488, %v1501
    %v1503 = vcombine.high %v1495, %v1495
    %v1504 = vcombine.high %v1502, %v1502
    %v1506 = vunpack.c.l.s4 1966171168
    %v1507 = vunpack.c.0.s8 %v1506
    %v1508 = vlaneseq
    %v1509 = vshrl.u32 %v1508, 7
    %v1510 = vsub.s32 %v1507, %v1509
    %v1511 = vrot.slane %v1495, %v1510
    %v1513 = vunpack.c.l.s4 1966171168
    %v1514 = vunpack.c.0.s8 %v1513
    %v1515 = vlaneseq
    %v1516 = vshrl.u32 %v1515, 7
    %v1517 = vsub.s32 %v1514, %v1516
    %v1518 = vrot.slane %v1502, %v1517
    %v1520 = vunpack.c.l.s4 1966171168
    %v1521 = vunpack.c.0.s8 %v1520
    %v1522 = vlaneseq
    %v1523 = vshrl.u32 %v1522, 7
    %v1524 = vsub.s32 %v1521, %v1523
    %v1525 = vrot.slane %v1503, %v1524
    %v1527 = vunpack.c.l.s4 1966171168
    %v1528 = vunpack.c.0.s8 %v1527
    %v1529 = vlaneseq
    %v1530 = vshrl.u32 %v1529, 7
    %v1531 = vsub.s32 %v1528, %v1530
    %v1532 = vrot.slane %v1504, %v1531
    %v1533 = vcombine.high %v1511, %v1511
    %v1534 = vcombine.high %v1518, %v1518
    %v1535 = vcombine.high %v1525, %v1525
    %v1536 = vcombine.high %v1532, %v1532
    %v1537 = vlaneseq
    %v1538 = vshrl.u32 %v1537, 7
    %v1539 = vsub.s32 0, %v1538
    %v1540 = vrot.slane %v1211, %v1539
    %v1541 = vlaneseq
    %v1542 = vshrl.u32 %v1541, 7
    %v1543 = vsub.s32 0, %v1542
    %v1544 = vrot.slane %v1225, %v1543
    %v1545 = vlaneseq
    %v1546 = vshrl.u32 %v1545, 7
    %v1547 = vsub.s32 0, %v1546
    %v1548 = vrot.slane %v1233, %v1547
    %v1549 = vlaneseq
    %v1550 = vshrl.u32 %v1549, 7
    %v1551 = vsub.s32 0, %v1550
    %v1552 = vrot.slane %v1235, %v1551
    %v1553 = vlaneseq
    %v1554 = vshrl.u32 %v1553, 7
    %v1555 = vsub.s32 0, %v1554
    %v1556 = vrot.slane %v1218, %v1555
    %v1557 = vlaneseq
    %v1558 = vshrl.u32 %v1557, 7
    %v1559 = vsub.s32 0, %v1558
    %v1560 = vrot.slane %v1232, %v1559
    %v1561 = vlaneseq
    %v1562 = vshrl.u32 %v1561, 7
    %v1563 = vsub.s32 0, %v1562
    %v1564 = vrot.slane %v1234, %v1563
    %v1565 = vlaneseq
    %v1566 = vshrl.u32 %v1565, 7
    %v1567 = vsub.s32 0, %v1566
    %v1568 = vrot.slane %v1236, %v1567
    %v1577 = vlaneseq
    %v1578 = vshrl.u32 %v1577, 7
    %v1579 = vsub.s32 0, %v1578
    %v1580 = vrot.slane %v1261, %v1579
    %v1581 = vlaneseq
    %v1582 = vshrl.u32 %v1581, 7
    %v1583 = vsub.s32 0, %v1582
    %v1584 = vrot.slane %v1275, %v1583
    %v1585 = vlaneseq
    %v1586 = vshrl.u32 %v1585, 7
    %v1587 = vsub.s32 0, %v1586
    %v1588 = vrot.slane %v1283, %v1587
    %v1589 = vlaneseq
    %v1590 = vshrl.u32 %v1589, 7
    %v1591 = vsub.s32 0, %v1590
    %v1592 = vrot.slane %v1285, %v1591
    %v1593 = vlaneseq
    %v1594 = vshrl.u32 %v1593, 7
    %v1595 = vsub.s32 0, %v1594
    %v1596 = vrot.slane %v1268, %v1595
    %v1597 = vlaneseq
    %v1598 = vshrl.u32 %v1597, 7
    %v1599 = vsub.s32 0, %v1598
    %v1600 = vrot.slane %v1282, %v1599
    %v1601 = vlaneseq
    %v1602 = vshrl.u32 %v1601, 7
    %v1603 = vsub.s32 0, %v1602
    %v1604 = vrot.slane %v1284, %v1603
    %v1605 = vlaneseq
    %v1606 = vshrl.u32 %v1605, 7
    %v1607 = vsub.s32 0, %v1606
    %v1608 = vrot.slane %v1286, %v1607
    %v1617 = vlaneseq
    %v1618 = vshrl.u32 %v1617, 7
    %v1619 = vsub.s32 0, %v1618
    %v1620 = vrot.slane %v1311, %v1619
    %v1621 = vlaneseq
    %v1622 = vshrl.u32 %v1621, 7
    %v1623 = vsub.s32 0, %v1622
    %v1624 = vrot.slane %v1325, %v1623
    %v1625 = vlaneseq
    %v1626 = vshrl.u32 %v1625, 7
    %v1627 = vsub.s32 0, %v1626
    %v1628 = vrot.slane %v1333, %v1627
    %v1629 = vlaneseq
    %v1630 = vshrl.u32 %v1629, 7
    %v1631 = vsub.s32 0, %v1630
    %v1632 = vrot.slane %v1335, %v1631
    %v1633 = vlaneseq
    %v1634 = vshrl.u32 %v1633, 7
    %v1635 = vsub.s32 0, %v1634
    %v1636 = vrot.slane %v1318, %v1635
    %v1637 = vlaneseq
    %v1638 = vshrl.u32 %v1637, 7
    %v1639 = vsub.s32 0, %v1638
    %v1640 = vrot.slane %v1332, %v1639
    %v1641 = vlaneseq
    %v1642 = vshrl.u32 %v1641, 7
    %v1643 = vsub.s32 0, %v1642
    %v1644 = vrot.slane %v1334, %v1643
    %v1645 = vlaneseq
    %v1646 = vshrl.u32 %v1645, 7
    %v1647 = vsub.s32 0, %v1646
    %v1648 = vrot.slane %v1336, %v1647
    %v1657 = vlaneseq
    %v1658 = vshrl.u32 %v1657, 7
    %v1659 = vsub.s32 0, %v1658
    %v1660 = vrot.slane %v1361, %v1659
    %v1661 = vlaneseq
    %v1662 = vshrl.u32 %v1661, 7
    %v1663 = vsub.s32 0, %v1662
    %v1664 = vrot.slane %v1375, %v1663
    %v1665 = vlaneseq
    %v1666 = vshrl.u32 %v1665, 7
    %v1667 = vsub.s32 0, %v1666
    %v1668 = vrot.slane %v1383, %v1667
    %v1669 = vlaneseq
    %v1670 = vshrl.u32 %v1669, 7
    %v1671 = vsub.s32 0, %v1670
    %v1672 = vrot.slane %v1385, %v1671
    %v1673 = vlaneseq
    %v1674 = vshrl.u32 %v1673, 7
    %v1675 = vsub.s32 0, %v1674
    %v1676 = vrot.slane %v1368, %v1675
    %v1677 = vlaneseq
    %v1678 = vshrl.u32 %v1677, 7
    %v1679 = vsub.s32 0, %v1678
    %v1680 = vrot.slane %v1382, %v1679
    %v1681 = vlaneseq
    %v1682 = vshrl.u32 %v1681, 7
    %v1683 = vsub.s32 0, %v1682
    %v1684 = vrot.slane %v1384, %v1683
    %v1685 = vlaneseq
    %v1686 = vshrl.u32 %v1685, 7
    %v1687 = vsub.s32 0, %v1686
    %v1688 = vrot.slane %v1386, %v1687
    %v1697 = vlaneseq
    %v1698 = vshrl.u32 %v1697, 7
    %v1699 = vsub.s32 0, %v1698
    %v1700 = vrot.slane %v1411, %v1699
    %v1701 = vlaneseq
    %v1702 = vshrl.u32 %v1701, 7
    %v1703 = vsub.s32 0, %v1702
    %v1704 = vrot.slane %v1425, %v1703
    %v1705 = vlaneseq
    %v1706 = vshrl.u32 %v1705, 7
    %v1707 = vsub.s32 0, %v1706
    %v1708 = vrot.slane %v1433, %v1707
    %v1709 = vlaneseq
    %v1710 = vshrl.u32 %v1709, 7
    %v1711 = vsub.s32 0, %v1710
    %v1712 = vrot.slane %v1435, %v1711
    %v1713 = vlaneseq
    %v1714 = vshrl.u32 %v1713, 7
    %v1715 = vsub.s32 0, %v1714
    %v1716 = vrot.slane %v1418, %v1715
    %v1717 = vlaneseq
    %v1718 = vshrl.u32 %v1717, 7
    %v1719 = vsub.s32 0, %v1718
    %v1720 = vrot.slane %v1432, %v1719
    %v1721 = vlaneseq
    %v1722 = vshrl.u32 %v1721, 7
    %v1723 = vsub.s32 0, %v1722
    %v1724 = vrot.slane %v1434, %v1723
    %v1725 = vlaneseq
    %v1726 = vshrl.u32 %v1725, 7
    %v1727 = vsub.s32 0, %v1726
    %v1728 = vrot.slane %v1436, %v1727
    %v1737 = vlaneseq
    %v1738 = vshrl.u32 %v1737, 7
    %v1739 = vsub.s32 0, %v1738
    %v1740 = vrot.slane %v1461, %v1739
    %v1741 = vlaneseq
    %v1742 = vshrl.u32 %v1741, 7
    %v1743 = vsub.s32 0, %v1742
    %v1744 = vrot.slane %v1475, %v1743
    %v1745 = vlaneseq
    %v1746 = vshrl.u32 %v1745, 7
    %v1747 = vsub.s32 0, %v1746
    %v1748 = vrot.slane %v1483, %v1747
    %v1749 = vlaneseq
    %v1750 = vshrl.u32 %v1749, 7
    %v1751 = vsub.s32 0, %v1750
    %v1752 = vrot.slane %v1485, %v1751
    %v1753 = vlaneseq
    %v1754 = vshrl.u32 %v1753, 7
    %v1755 = vsub.s32 0, %v1754
    %v1756 = vrot.slane %v1468, %v1755
    %v1757 = vlaneseq
    %v1758 = vshrl.u32 %v1757, 7
    %v1759 = vsub.s32 0, %v1758
    %v1760 = vrot.slane %v1482, %v1759
    %v1761 = vlaneseq
    %v1762 = vshrl.u32 %v1761, 7
    %v1763 = vsub.s32 0, %v1762
    %v1764 = vrot.slane %v1484, %v1763
    %v1765 = vlaneseq
    %v1766 = vshrl.u32 %v1765, 7
    %v1767 = vsub.s32 0, %v1766
    %v1768 = vrot.slane %v1486, %v1767
    %v1777 = vlaneseq
    %v1778 = vshrl.u32 %v1777, 7
    %v1779 = vsub.s32 0, %v1778
    %v1780 = vrot.slane %v1511, %v1779
    %v1781 = vlaneseq
    %v1782 = vshrl.u32 %v1781, 7
    %v1783 = vsub.s32 0, %v1782
    %v1784 = vrot.slane %v1525, %v1783
    %v1785 = vlaneseq
    %v1786 = vshrl.u32 %v1785, 7
    %v1787 = vsub.s32 0, %v1786
    %v1788 = vrot.slane %v1533, %v1787
    %v1789 = vlaneseq
    %v1790 = vshrl.u32 %v1789, 7
    %v1791 = vsub.s32 0, %v1790
    %v1792 = vrot.slane %v1535, %v1791
    %v1793 = vlaneseq
    %v1794 = vshrl.u32 %v1793, 7
    %v1795 = vsub.s32 0, %v1794
    %v1796 = vrot.slane %v1518, %v1795
    %v1797 = vlaneseq
    %v1798 = vshrl.u32 %v1797, 7
    %v1799 = vsub.s32 0, %v1798
    %v1800 = vrot.slane %v1532, %v1799
    %v1801 = vlaneseq
    %v1802 = vshrl.u32 %v1801, 7
    %v1803 = vsub.s32 0, %v1802
    %v1804 = vrot.slane %v1534, %v1803
    %v1805 = vlaneseq
    %v1806 = vshrl.u32 %v1805, 7
    %v1807 = vsub.s32 0, %v1806
    %v1808 = vrot.slane %v1536, %v1807
    %vm1817 = vcmask 1040384
    %v1818 = vsel %vm1817, %v1153, %v1540
    %v1819 = vsel %vm1817, %v1167, %v1544
    %v1820 = vsel %vm1817, %v1175, %v1548
    %v1821 = vsel %vm1817, %v1177, %v1552
    %v1822 = vsel %vm1817, %v1160, %v1556
    %v1823 = vsel %vm1817, %v1174, %v1560
    %v1824 = vsel %vm1817, %v1176, %v1564
    %v1825 = vsel %vm1817, %v1178, %v1568
    %vm1826 = vcmask 1041408
    %v1827 = vsel %vm1826, %v1818, %v1580
    %v1828 = vsel %vm1826, %v1819, %v1584
    %v1829 = vsel %vm1826, %v1820, %v1588
    %v1830 = vsel %vm1826, %v1821, %v1592
    %v1831 = vsel %vm1826, %v1822, %v1596
    %v1832 = vsel %vm1826, %v1823, %v1600
    %v1833 = vsel %vm1826, %v1824, %v1604
    %v1834 = vsel %vm1826, %v1825, %v1608
    %vm1835 = vcmask 1042432
    %v1836 = vsel %vm1835, %v1827, %v1620
    %v1837 = vsel %vm1835, %v1828, %v1624
    %v1838 = vsel %vm1835, %v1829, %v1628
    %v1839 = vsel %vm1835, %v1830, %v1632
    %v1840 = vsel %vm1835, %v1831, %v1636
    %v1841 = vsel %vm1835, %v1832, %v1640
    %v1842 = vsel %vm1835, %v1833, %v1644
    %v1843 = vsel %vm1835, %v1834, %v1648
    %vm1844 = vcmask 1043456
    %v1845 = vsel %vm1844, %v1836, %v1660
    %v1846 = vsel %vm1844, %v1837, %v1664
    %v1847 = vsel %vm1844, %v1838, %v1668
    %v1848 = vsel %vm1844, %v1839, %v1672
    %v1849 = vsel %vm1844, %v1840, %v1676
    %v1850 = vsel %vm1844, %v1841, %v1680
    %v1851 = vsel %vm1844, %v1842, %v1684
    %v1852 = vsel %vm1844, %v1843, %v1688
    %vm1853 = vcmask 1044480
    %v1854 = vsel %vm1853, %v1845, %v1700
    %v1855 = vsel %vm1853, %v1846, %v1704
    %v1856 = vsel %vm1853, %v1847, %v1708
    %v1857 = vsel %vm1853, %v1848, %v1712
    %v1858 = vsel %vm1853, %v1849, %v1716
    %v1859 = vsel %vm1853, %v1850, %v1720
    %v1860 = vsel %vm1853, %v1851, %v1724
    %v1861 = vsel %vm1853, %v1852, %v1728
    %vm1862 = vcmask 1045504
    %v1863 = vsel %vm1862, %v1854, %v1740
    %v1864 = vsel %vm1862, %v1855, %v1744
    %v1865 = vsel %vm1862, %v1856, %v1748
    %v1866 = vsel %vm1862, %v1857, %v1752
    %v1867 = vsel %vm1862, %v1858, %v1756
    %v1868 = vsel %vm1862, %v1859, %v1760
    %v1869 = vsel %vm1862, %v1860, %v1764
    %v1870 = vsel %vm1862, %v1861, %v1768
    %vm1871 = vcmask 1046528
    %v1872 = vsel %vm1871, %v1863, %v1780
    %v1873 = vsel %vm1871, %v1864, %v1784
    %v1874 = vsel %vm1871, %v1865, %v1788
    %v1875 = vsel %vm1871, %v1866, %v1792
    %v1876 = vsel %vm1871, %v1867, %v1796
    %v1877 = vsel %vm1871, %v1868, %v1800
    %v1878 = vsel %vm1871, %v1869, %v1804
    %v1879 = vsel %vm1871, %v1870, %v1808
    %v1880 = vpack.c.bf16 %v1872, %v1872
    %v1881 = vpack.c.bf16 %v1873, %v1873
    %v1882 = vpack.c.bf16 %v1874, %v1874
    %v1883 = vpack.c.bf16 %v1875, %v1875
    %v1884 = vpack.c.bf16 %v1876, %v1876
    %v1885 = vpack.c.bf16 %v1877, %v1877
    %v1886 = vpack.c.bf16 %v1878, %v1878
    %v1887 = vpack.c.bf16 %v1879, %v1879
    %1888 = vst [vmem:[%s5] sm:$0xf] %v1880
    %1889 = vst [vmem:[%s5 + $0x4] sm:$0xf] %v1881
    %1890 = vst [vmem:[%s5 + $0x8] sm:$0xf] %v1882
    %1891 = vst [vmem:[%s5 + $0xc] sm:$0xf] %v1883
    %1892 = vst [vmem:[%s5 + $0x10] sm:$0xf] %v1884
    %1893 = vst [vmem:[%s5 + $0x14] sm:$0xf] %v1885
    %1894 = vst [vmem:[%s5 + $0x18] sm:$0xf] %v1886
    %1895 = vst [vmem:[%s5 + $0x1c] sm:$0xf] %v1887
    // Predicated region
    $region42: #{_lm_forward_padded.2} parent=1 // pred_check
      _
    $region43: #{_lm_forward_padded.2} parent=1 // pred_check_branch
      %1897 = sbr.rel (0) target = $region45
    $region44: #{_lm_forward_padded.2} parent=1 // pred_region
      _
    $region45: #{_lm_forward_padded.2} parent=1 // pred_fallthru
      _
    // Predicated region
    $region46: #{_lm_forward_padded.2} parent=1 // pred_check
      _
    $region47: #{_lm_forward_padded.2} parent=1 // pred_check_branch
      %1899 = sbr.rel (0) target = $region49
    $region48: #{_lm_forward_padded.2} parent=1 // pred_region
      _
    $region49: #{_lm_forward_padded.2} parent=1 // pred_fallthru
      _
    %1900 = vsyncpa [#allocation4], 1
    %1901 = vsyncpa [#allocation6], 1
    %1902 = vsyncpa [#allocation9], 1

// kernel: _lm_forward_padded.3
$region0: #{_lm_forward_padded.3}
  #allocation0 [shape = 'u32[]', space=smem, size = 0x4, offset = 0x4, fixed_abs, tag = 'smem constant byte address 0x4 - core index']
  #allocation1 [shape = 'u32[144,128]{1,0:T(1,128)}', space=vmem, size = 0x12000, scoped, tag = 'internal scratch']
  #allocation2 [shape = 'f32[64,512]{1,0:T(8,128)}', space=vmem, size = 0x20000, scoped, tag = 'scratch operand']
  %s0 = inlined_call_operand.vmem [shape: bf16[64,128], index: 0, kind: input, shape index: {}]
  %s1 = inlined_call_operand.hbm [shape: bf16[128,512], index: 1, kind: input, shape index: {}]
  %s2 = inlined_call_operand.vmem [shape: f32[1,512], index: 2, kind: input, shape index: {}]
  %s3 = inlined_call_operand.hbm [shape: f32[64,512], index: 3, kind: output, shape index: {}]
  %s4 = sld [smem:[#allocation0]]
  $region34: #{_lm_forward_padded.3} parent=0
    _
  %s6 = ssub.s32 1, %s4
  %s7 = scalar_select 0, %s6, %s4
  $region1: #{_lm_forward_padded.3} parent=0
    #allocation3 [shape = 'u8[131072]{0}', space=vmem, size = 0x20000, scoped, tag = 'input window, operand 1, single buffered']
    #allocation4 [shape = 's32[1]{0}', space=sflag, size = 0x4, scoped, tag = 'scoped memory for _lm_forward_padded.3']
    #allocation5 [shape = 's32[1]{0}', space=sflag, size = 0x4, scoped, tag = 'scoped memory for _lm_forward_padded.3']
    #allocation6 [shape = 'u8[131072]{0}', space=vmem, size = 0x20000, scoped, tag = 'output window, operand 0, single buffered']
    %8 = vsyncpa [#allocation4], 0
    %9 = vsyncpa [#allocation5], 0
    // Predicated region
    $region2: #{_lm_forward_padded.3} parent=1 // pred_check
      _
    $region3: #{_lm_forward_padded.3} parent=1 // pred_check_branch
      %11 = sbr.rel (0) target = $region5
    $region4: #{_lm_forward_padded.3} parent=1 // pred_region
      _
    $region5: #{_lm_forward_padded.3} parent=1 // pred_fallthru
      _
    // Predicated region
    $region6: #{_lm_forward_padded.3} parent=1 // pred_check
      _
    $region7: #{_lm_forward_padded.3} parent=1 // pred_check_branch
      %13 = sbr.rel (0) target = $region9
    $region8: #{_lm_forward_padded.3} parent=1 // pred_region
      %s15 = ssub.s32 4096, 4096
      %16 = vsyncadd [#allocation4], %s15
      %s17 = sshll.u32 [#allocation3], 4
      %s18 = int_to_ptr.vmem [resolvable:$true] %s17
      %23 = dma.hbm_to_vmem [thread:$0]  %s1, 4096, %s18, [#allocation4], 256, 256, 16
    $region9: #{_lm_forward_padded.3} parent=1 // pred_fallthru
      _
    // Predicated region
    $region10: #{_lm_forward_padded.3} parent=1 // pred_check
      _
    $region11: #{_lm_forward_padded.3} parent=1 // pred_check_branch
      %25 = sbr.rel (0) target = $region13
    $region12: #{_lm_forward_padded.3} parent=1 // pred_region
      _
    $region13: #{_lm_forward_padded.3} parent=1 // pred_fallthru
      _
    // Predicated region
    $region14: #{_lm_forward_padded.3} parent=1 // pred_check
      _
    $region15: #{_lm_forward_padded.3} parent=1 // pred_check_branch
      %27 = sbr.rel (0) target = $region17
    $region16: #{_lm_forward_padded.3} parent=1 // pred_region
      %28 = dma.done [#allocation4], 4096
    $region17: #{_lm_forward_padded.3} parent=1 // pred_fallthru
      _
    %p30 = scmp.eq.s32.totalorder 0, 0
    // Predicated region
    $region18: #{_lm_forward_padded.3} parent=1 // pred_check
      %p31 = pneg %p30
    $region19: #{_lm_forward_padded.3} parent=1 // pred_check_branch
      %33 = sbr.rel (%p31) target = $region21
    $region20: #{_lm_forward_padded.3} parent=1 // pred_region
      %34 = vst [vmem:[#allocation2] sm:$0xff] 0.0
      %35 = vst [vmem:[#allocation2 + $0x8] sm:$0xff] 0.0
      %36 = vst [vmem:[#allocation2 + $0x10] sm:$0xff] 0.0
      %37 = vst [vmem:[#allocation2 + $0x18] sm:$0xff] 0.0
      %38 = vst [vmem:[#allocation2 + $0x20] sm:$0xff] 0.0
      %39 = vst [vmem:[#allocation2 + $0x28] sm:$0xff] 0.0
      %40 = vst [vmem:[#allocation2 + $0x30] sm:$0xff] 0.0
      %41 = vst [vmem:[#allocation2 + $0x38] sm:$0xff] 0.0
      %42 = vst [vmem:[#allocation2 + $0x40] sm:$0xff] 0.0
      %43 = vst [vmem:[#allocation2 + $0x48] sm:$0xff] 0.0
      %44 = vst [vmem:[#allocation2 + $0x50] sm:$0xff] 0.0
      %45 = vst [vmem:[#allocation2 + $0x58] sm:$0xff] 0.0
      %46 = vst [vmem:[#allocation2 + $0x60] sm:$0xff] 0.0
      %47 = vst [vmem:[#allocation2 + $0x68] sm:$0xff] 0.0
      %48 = vst [vmem:[#allocation2 + $0x70] sm:$0xff] 0.0
      %49 = vst [vmem:[#allocation2 + $0x78] sm:$0xff] 0.0
      %50 = vst [vmem:[#allocation2 + $0x80] sm:$0xff] 0.0
      %51 = vst [vmem:[#allocation2 + $0x88] sm:$0xff] 0.0
      %52 = vst [vmem:[#allocation2 + $0x90] sm:$0xff] 0.0
      %53 = vst [vmem:[#allocation2 + $0x98] sm:$0xff] 0.0
      %54 = vst [vmem:[#allocation2 + $0xa0] sm:$0xff] 0.0
      %55 = vst [vmem:[#allocation2 + $0xa8] sm:$0xff] 0.0
      %56 = vst [vmem:[#allocation2 + $0xb0] sm:$0xff] 0.0
      %57 = vst [vmem:[#allocation2 + $0xb8] sm:$0xff] 0.0
      %58 = vst [vmem:[#allocation2 + $0xc0] sm:$0xff] 0.0
      %59 = vst [vmem:[#allocation2 + $0xc8] sm:$0xff] 0.0
      %60 = vst [vmem:[#allocation2 + $0xd0] sm:$0xff] 0.0
      %61 = vst [vmem:[#allocation2 + $0xd8] sm:$0xff] 0.0
      %62 = vst [vmem:[#allocation2 + $0xe0] sm:$0xff] 0.0
      %63 = vst [vmem:[#allocation2 + $0xe8] sm:$0xff] 0.0
      %64 = vst [vmem:[#allocation2 + $0xf0] sm:$0xff] 0.0
      %65 = vst [vmem:[#allocation2 + $0xf8] sm:$0xff] 0.0
    $region21: #{_lm_forward_padded.3} parent=1 // pred_fallthru
      _
    %v66 = vld [vmem:[#allocation2] sm:$0xff]
    %v67 = vld [vmem:[#allocation2 + $0x8] sm:$0xff]
    %v68 = vld [vmem:[#allocation2 + $0x10] sm:$0xff]
    %v69 = vld [vmem:[#allocation2 + $0x18] sm:$0xff]
    %v70 = vld [vmem:[#allocation2 + $0x20] sm:$0xff]
    %v71 = vld [vmem:[#allocation2 + $0x28] sm:$0xff]
    %v72 = vld [vmem:[#allocation2 + $0x30] sm:$0xff]
    %v73 = vld [vmem:[#allocation2 + $0x38] sm:$0xff]
    %v74 = vld [vmem:[#allocation2 + $0x40] sm:$0xff]
    %v75 = vld [vmem:[#allocation2 + $0x48] sm:$0xff]
    %v76 = vld [vmem:[#allocation2 + $0x50] sm:$0xff]
    %v77 = vld [vmem:[#allocation2 + $0x58] sm:$0xff]
    %v78 = vld [vmem:[#allocation2 + $0x60] sm:$0xff]
    %v79 = vld [vmem:[#allocation2 + $0x68] sm:$0xff]
    %v80 = vld [vmem:[#allocation2 + $0x70] sm:$0xff]
    %v81 = vld [vmem:[#allocation2 + $0x78] sm:$0xff]
    %v82 = vld [vmem:[#allocation2 + $0x80] sm:$0xff]
    %v83 = vld [vmem:[#allocation2 + $0x88] sm:$0xff]
    %v84 = vld [vmem:[#allocation2 + $0x90] sm:$0xff]
    %v85 = vld [vmem:[#allocation2 + $0x98] sm:$0xff]
    %v86 = vld [vmem:[#allocation2 + $0xa0] sm:$0xff]
    %v87 = vld [vmem:[#allocation2 + $0xa8] sm:$0xff]
    %v88 = vld [vmem:[#allocation2 + $0xb0] sm:$0xff]
    %v89 = vld [vmem:[#allocation2 + $0xb8] sm:$0xff]
    %v90 = vld [vmem:[#allocation2 + $0xc0] sm:$0xff]
    %v91 = vld [vmem:[#allocation2 + $0xc8] sm:$0xff]
    %v92 = vld [vmem:[#allocation2 + $0xd0] sm:$0xff]
    %v93 = vld [vmem:[#allocation2 + $0xd8] sm:$0xff]
    %v94 = vld [vmem:[#allocation2 + $0xe0] sm:$0xff]
    %v95 = vld [vmem:[#allocation2 + $0xe8] sm:$0xff]
    %v96 = vld [vmem:[#allocation2 + $0xf0] sm:$0xff]
    %v97 = vld [vmem:[#allocation2 + $0xf8] sm:$0xff]
    %v98 = vld [vmem:[%s0] sm:$0xf]
    %v99 = vld [vmem:[%s0 + $0x4] sm:$0xf]
    %v100 = vld [vmem:[%s0 + $0x8] sm:$0xf]
    %v101 = vld [vmem:[%s0 + $0xc] sm:$0xf]
    %v102 = vld [vmem:[%s0 + $0x10] sm:$0xf]
    %v103 = vld [vmem:[%s0 + $0x14] sm:$0xf]
    %v104 = vld [vmem:[%s0 + $0x18] sm:$0xf]
    %v105 = vld [vmem:[%s0 + $0x1c] sm:$0xf]
    %v106 = vld [vmem:[#allocation3] sm:$0xff]
    %v107 = vld [vmem:[#allocation3 + $0x8] sm:$0xff]
    %v108 = vld [vmem:[#allocation3 + $0x10] sm:$0xff]
    %v109 = vld [vmem:[#allocation3 + $0x18] sm:$0xff]
    %v110 = vld [vmem:[#allocation3 + $0x20] sm:$0xff]
    %v111 = vld [vmem:[#allocation3 + $0x28] sm:$0xff]
    %v112 = vld [vmem:[#allocation3 + $0x30] sm:$0xff]
    %v113 = vld [vmem:[#allocation3 + $0x38] sm:$0xff]
    %v114 = vld [vmem:[#allocation3 + $0x40] sm:$0xff]
    %v115 = vld [vmem:[#allocation3 + $0x48] sm:$0xff]
    %v116 = vld [vmem:[#allocation3 + $0x50] sm:$0xff]
    %v117 = vld [vmem:[#allocation3 + $0x58] sm:$0xff]
    %v118 = vld [vmem:[#allocation3 + $0x60] sm:$0xff]
    %v119 = vld [vmem:[#allocation3 + $0x68] sm:$0xff]
    %v120 = vld [vmem:[#allocation3 + $0x70] sm:$0xff]
    %v121 = vld [vmem:[#allocation3 + $0x78] sm:$0xff]
    %v122 = vld [vmem:[#allocation3 + $0x80] sm:$0xff]
    %v123 = vld [vmem:[#allocation3 + $0x88] sm:$0xff]
    %v124 = vld [vmem:[#allocation3 + $0x90] sm:$0xff]
    %v125 = vld [vmem:[#allocation3 + $0x98] sm:$0xff]
    %v126 = vld [vmem:[#allocation3 + $0xa0] sm:$0xff]
    %v127 = vld [vmem:[#allocation3 + $0xa8] sm:$0xff]
    %v128 = vld [vmem:[#allocation3 + $0xb0] sm:$0xff]
    %v129 = vld [vmem:[#allocation3 + $0xb8] sm:$0xff]
    %v130 = vld [vmem:[#allocation3 + $0xc0] sm:$0xff]
    %v131 = vld [vmem:[#allocation3 + $0xc8] sm:$0xff]
    %v132 = vld [vmem:[#allocation3 + $0xd0] sm:$0xff]
    %v133 = vld [vmem:[#allocation3 + $0xd8] sm:$0xff]
    %v134 = vld [vmem:[#allocation3 + $0xe0] sm:$0xff]
    %v135 = vld [vmem:[#allocation3 + $0xe8] sm:$0xff]
    %v136 = vld [vmem:[#allocation3 + $0xf0] sm:$0xff]
    %v137 = vld [vmem:[#allocation3 + $0xf8] sm:$0xff]
    %v146 = vunpack.c.l.b16 %v98
    %v147 = vunpack.c.l.b16 %v99
    %v148 = vunpack.c.l.b16 %v100
    %v149 = vunpack.c.l.b16 %v101
    %v150 = vunpack.c.l.b16 %v102
    %v151 = vunpack.c.l.b16 %v103
    %v152 = vunpack.c.l.b16 %v104
    %v153 = vunpack.c.l.b16 %v105
    %v154 = vpack.c.b16 %v147, %v146
    %v155 = vpack.c.b16 %v149, %v148
    %v156 = vpack.c.b16 %v151, %v150
    %v157 = vpack.c.b16 %v153, %v152
    %v194 = vunpack.c.l.b16 %v106
    %v195 = vunpack.c.h.b16 %v106
    %v196 = vunpack.c.l.b16 %v107
    %v197 = vunpack.c.h.b16 %v107
    %v198 = vunpack.c.l.b16 %v108
    %v199 = vunpack.c.h.b16 %v108
    %v200 = vunpack.c.l.b16 %v109
    %v201 = vunpack.c.h.b16 %v109
    %v202 = vunpack.c.l.b16 %v110
    %v203 = vunpack.c.h.b16 %v110
    %v204 = vunpack.c.l.b16 %v111
    %v205 = vunpack.c.h.b16 %v111
    %v206 = vunpack.c.l.b16 %v112
    %v207 = vunpack.c.h.b16 %v112
    %v208 = vunpack.c.l.b16 %v113
    %v209 = vunpack.c.h.b16 %v113
    %v210 = vunpack.c.l.b16 %v114
    %v211 = vunpack.c.h.b16 %v114
    %v212 = vunpack.c.l.b16 %v115
    %v213 = vunpack.c.h.b16 %v115
    %v214 = vunpack.c.l.b16 %v116
    %v215 = vunpack.c.h.b16 %v116
    %v216 = vunpack.c.l.b16 %v117
    %v217 = vunpack.c.h.b16 %v117
    %v218 = vunpack.c.l.b16 %v118
    %v219 = vunpack.c.h.b16 %v118
    %v220 = vunpack.c.l.b16 %v119
    %v221 = vunpack.c.h.b16 %v119
    %v222 = vunpack.c.l.b16 %v120
    %v223 = vunpack.c.h.b16 %v120
    %v224 = vunpack.c.l.b16 %v121
    %v225 = vunpack.c.h.b16 %v121
    %v226 = vunpack.c.l.b16 %v122
    %v227 = vunpack.c.h.b16 %v122
    %v228 = vunpack.c.l.b16 %v123
    %v229 = vunpack.c.h.b16 %v123
    %v230 = vunpack.c.l.b16 %v124
    %v231 = vunpack.c.h.b16 %v124
    %v232 = vunpack.c.l.b16 %v125
    %v233 = vunpack.c.h.b16 %v125
    %v234 = vunpack.c.l.b16 %v126
    %v235 = vunpack.c.h.b16 %v126
    %v236 = vunpack.c.l.b16 %v127
    %v237 = vunpack.c.h.b16 %v127
    %v238 = vunpack.c.l.b16 %v128
    %v239 = vunpack.c.h.b16 %v128
    %v240 = vunpack.c.l.b16 %v129
    %v241 = vunpack.c.h.b16 %v129
    %v242 = vunpack.c.l.b16 %v130
    %v243 = vunpack.c.h.b16 %v130
    %v244 = vunpack.c.l.b16 %v131
    %v245 = vunpack.c.h.b16 %v131
    %v246 = vunpack.c.l.b16 %v132
    %v247 = vunpack.c.h.b16 %v132
    %v248 = vunpack.c.l.b16 %v133
    %v249 = vunpack.c.h.b16 %v133
    %v250 = vunpack.c.l.b16 %v134
    %v251 = vunpack.c.h.b16 %v134
    %v252 = vunpack.c.l.b16 %v135
    %v253 = vunpack.c.h.b16 %v135
    %v254 = vunpack.c.l.b16 %v136
    %v255 = vunpack.c.h.b16 %v136
    %v256 = vunpack.c.l.b16 %v137
    %v257 = vunpack.c.h.b16 %v137
    %v258 = vpack.c.b16 %v198, %v194
    %v259 = vpack.c.b16 %v199, %v195
    %v260 = vpack.c.b16 %v200, %v196
    %v261 = vpack.c.b16 %v201, %v197
    %v262 = vpack.c.b16 %v206, %v202
    %v263 = vpack.c.b16 %v207, %v203
    %v264 = vpack.c.b16 %v208, %v204
    %v265 = vpack.c.b16 %v209, %v205
    %v266 = vpack.c.b16 %v214, %v210
    %v267 = vpack.c.b16 %v215, %v211
    %v268 = vpack.c.b16 %v216, %v212
    %v269 = vpack.c.b16 %v217, %v213
    %v270 = vpack.c.b16 %v222, %v218
    %v271 = vpack.c.b16 %v223, %v219
    %v272 = vpack.c.b16 %v224, %v220
    %v273 = vpack.c.b16 %v225, %v221
    %v274 = vpack.c.b16 %v230, %v226
    %v275 = vpack.c.b16 %v231, %v227
    %v276 = vpack.c.b16 %v232, %v228
    %v277 = vpack.c.b16 %v233, %v229
    %v278 = vpack.c.b16 %v238, %v234
    %v279 = vpack.c.b16 %v239, %v235
    %v280 = vpack.c.b16 %v240, %v236
    %v281 = vpack.c.b16 %v241, %v237
    %v282 = vpack.c.b16 %v246, %v242
    %v283 = vpack.c.b16 %v247, %v243
    %v284 = vpack.c.b16 %v248, %v244
    %v285 = vpack.c.b16 %v249, %v245
    %v286 = vpack.c.b16 %v254, %v250
    %v287 = vpack.c.b16 %v255, %v251
    %v288 = vpack.c.b16 %v256, %v252
    %v289 = vpack.c.b16 %v257, %v253
    %322 = vmatprep.subr.bf16.mxu0 %v259
    %323 = vmatpush1.bf16.msra.mxu0 %v258
    %324 = vmatprep.subr.bf16.mxu0 %v263
    %325 = vmatpush1.bf16.msra.mxu0 %v262
    %326 = vmatprep.subr.bf16.mxu0 %v267
    %327 = vmatpush1.bf16.msra.mxu0 %v266
    %328 = vmatprep.subr.bf16.mxu0 %v271
    %329 = vmatpush1.bf16.msra.mxu0 %v270
    %330 = vmatprep.subr.bf16.mxu0 %v275
    %331 = vmatpush1.bf16.msra.mxu0 %v274
    %332 = vmatprep.subr.bf16.mxu0 %v279
    %333 = vmatpush1.bf16.msra.mxu0 %v278
    %334 = vmatprep.subr.bf16.mxu0 %v283
    %335 = vmatpush1.bf16.msra.mxu0 %v282
    %336 = vmatprep.subr.bf16.mxu0 %v287
    %337 = vmatpush1.bf16.msra.mxu0 %v286
    %338 = vmatprep.subr.bf16.mxu0 0
    %339 = vmatpush1.bf16.msra.mxu0 0
    %340 = vmatprep.subr.bf16.mxu0 0
    %341 = vmatpush1.bf16.msra.mxu0 0
    %342 = vmatprep.subr.bf16.mxu0 0
    %343 = vmatpush1.bf16.msra.mxu0 0
    %344 = vmatprep.subr.bf16.mxu0 0
    %345 = vmatpush1.bf16.msra.mxu0 0
    %346 = vmatprep.subr.bf16.mxu0 0
    %347 = vmatpush1.bf16.msra.mxu0 0
    %348 = vmatprep.subr.bf16.mxu0 0
    %349 = vmatpush1.bf16.msra.mxu0 0
    %350 = vmatprep.subr.bf16.mxu0 0
    %351 = vmatpush1.bf16.msra.mxu0 0
    %352 = vmatprep.subr.bf16.mxu0 0
    %353 = vmatpush1.bf16.msra.mxu0 0
    %354 = vmatprep.mubr.bf16.mxu0 0
    %355 = vmatmul.mubr.bf16.gmra.mrb[0].mxu0 %v154
    %v356 = vpop.f32.mrb[0].mxu0
    %v357 = vadd.f32 0.0, %v356
    %v358 = vpop.f32.mrb[0].mxu0
    %v359 = vadd.f32 0.0, %v358
    %v360 = vpop.f32.mrb[0].mxu0
    %v361 = vadd.f32 0.0, %v360
    %v362 = vpop.f32.mrb[0].mxu0
    %v363 = vadd.f32 0.0, %v362
    %364 = vmatprep.mubr.bf16.mxu0 0
    %365 = vmatmul.mubr.bf16.gmra.mrb[0].mxu0 %v155
    %v366 = vpop.f32.mrb[0].mxu0
    %v367 = vadd.f32 0.0, %v366
    %v368 = vpop.f32.mrb[0].mxu0
    %v369 = vadd.f32 0.0, %v368
    %v370 = vpop.f32.mrb[0].mxu0
    %v371 = vadd.f32 0.0, %v370
    %v372 = vpop.f32.mrb[0].mxu0
    %v373 = vadd.f32 0.0, %v372
    %374 = vmatprep.mubr.bf16.mxu0 0
    %375 = vmatmul.mubr.bf16.gmra.mrb[0].mxu0 %v156
    %v376 = vpop.f32.mrb[0].mxu0
    %v377 = vadd.f32 0.0, %v376
    %v378 = vpop.f32.mrb[0].mxu0
    %v379 = vadd.f32 0.0, %v378
    %v380 = vpop.f32.mrb[0].mxu0
    %v381 = vadd.f32 0.0, %v380
    %v382 = vpop.f32.mrb[0].mxu0
    %v383 = vadd.f32 0.0, %v382
    %384 = vmatprep.mubr.bf16.mxu0 0
    %385 = vmatmul.mubr.bf16.gmra.mrb[0].mxu0 %v157
    %v386 = vpop.f32.mrb[0].mxu0
    %v387 = vadd.f32 0.0, %v386
    %v388 = vpop.f32.mrb[0].mxu0
    %v389 = vadd.f32 0.0, %v388
    %v390 = vpop.f32.mrb[0].mxu0
    %v391 = vadd.f32 0.0, %v390
    %v392 = vpop.f32.mrb[0].mxu0
    %v393 = vadd.f32 0.0, %v392
    %394 = vdwg.mxu0
    %395 = vmatprep.subr.bf16.mxu0 %v261
    %396 = vmatpush1.bf16.msra.mxu0 %v260
    %397 = vmatprep.subr.bf16.mxu0 %v265
    %398 = vmatpush1.bf16.msra.mxu0 %v264
    %399 = vmatprep.subr.bf16.mxu0 %v269
    %400 = vmatpush1.bf16.msra.mxu0 %v268
    %401 = vmatprep.subr.bf16.mxu0 %v273
    %402 = vmatpush1.bf16.msra.mxu0 %v272
    %403 = vmatprep.subr.bf16.mxu0 %v277
    %404 = vmatpush1.bf16.msra.mxu0 %v276
    %405 = vmatprep.subr.bf16.mxu0 %v281
    %406 = vmatpush1.bf16.msra.mxu0 %v280
    %407 = vmatprep.subr.bf16.mxu0 %v285
    %408 = vmatpush1.bf16.msra.mxu0 %v284
    %409 = vmatprep.subr.bf16.mxu0 %v289
    %410 = vmatpush1.bf16.msra.mxu0 %v288
    %411 = vmatprep.subr.bf16.mxu0 0
    %412 = vmatpush1.bf16.msra.mxu0 0
    %413 = vmatprep.subr.bf16.mxu0 0
    %414 = vmatpush1.bf16.msra.mxu0 0
    %415 = vmatprep.subr.bf16.mxu0 0
    %416 = vmatpush1.bf16.msra.mxu0 0
    %417 = vmatprep.subr.bf16.mxu0 0
    %418 = vmatpush1.bf16.msra.mxu0 0
    %419 = vmatprep.subr.bf16.mxu0 0
    %420 = vmatpush1.bf16.msra.mxu0 0
    %421 = vmatprep.subr.bf16.mxu0 0
    %422 = vmatpush1.bf16.msra.mxu0 0
    %423 = vmatprep.subr.bf16.mxu0 0
    %424 = vmatpush1.bf16.msra.mxu0 0
    %425 = vmatprep.subr.bf16.mxu0 0
    %426 = vmatpush1.bf16.msra.mxu0 0
    %427 = vmatprep.mubr.bf16.mxu0 0
    %428 = vmatmul.mubr.bf16.gmra.mrb[0].mxu0 %v154
    %v429 = vpop.f32.mrb[0].mxu0
    %v430 = vadd.f32 0.0, %v429
    %v431 = vpop.f32.mrb[0].mxu0
    %v432 = vadd.f32 0.0, %v431
    %v433 = vpop.f32.mrb[0].mxu0
    %v434 = vadd.f32 0.0, %v433
    %v435 = vpop.f32.mrb[0].mxu0
    %v436 = vadd.f32 0.0, %v435
    %437 = vmatprep.mubr.bf16.mxu0 0
    %438 = vmatmul.mubr.bf16.gmra.mrb[0].mxu0 %v155
    %v439 = vpop.f32.mrb[0].mxu0
    %v440 = vadd.f32 0.0, %v439
    %v441 = vpop.f32.mrb[0].mxu0
    %v442 = vadd.f32 0.0, %v441
    %v443 = vpop.f32.mrb[0].mxu0
    %v444 = vadd.f32 0.0, %v443
    %v445 = vpop.f32.mrb[0].mxu0
    %v446 = vadd.f32 0.0, %v445
    %447 = vmatprep.mubr.bf16.mxu0 0
    %448 = vmatmul.mubr.bf16.gmra.mrb[0].mxu0 %v156
    %v449 = vpop.f32.mrb[0].mxu0
    %v450 = vadd.f32 0.0, %v449
    %v451 = vpop.f32.mrb[0].mxu0
    %v452 = vadd.f32 0.0, %v451
    %v453 = vpop.f32.mrb[0].mxu0
    %v454 = vadd.f32 0.0, %v453
    %v455 = vpop.f32.mrb[0].mxu0
    %v456 = vadd.f32 0.0, %v455
    %457 = vmatprep.mubr.bf16.mxu0 0
    %458 = vmatmul.mubr.bf16.gmra.mrb[0].mxu0 %v157
    %v459 = vpop.f32.mrb[0].mxu0
    %v460 = vadd.f32 0.0, %v459
    %v461 = vpop.f32.mrb[0].mxu0
    %v462 = vadd.f32 0.0, %v461
    %v463 = vpop.f32.mrb[0].mxu0
    %v464 = vadd.f32 0.0, %v463
    %v465 = vpop.f32.mrb[0].mxu0
    %v466 = vadd.f32 0.0, %v465
    %467 = vdwg.mxu0
    %v468 = vadd.f32 %v66, %v357
    %v469 = vadd.f32 %v67, %v359
    %v470 = vadd.f32 %v68, %v430
    %v471 = vadd.f32 %v69, %v432
    %v472 = vadd.f32 %v70, %v361
    %v473 = vadd.f32 %v71, %v363
    %v474 = vadd.f32 %v72, %v434
    %v475 = vadd.f32 %v73, %v436
    %v476 = vadd.f32 %v74, %v367
    %v477 = vadd.f32 %v75, %v369
    %v478 = vadd.f32 %v76, %v440
    %v479 = vadd.f32 %v77, %v442
    %v480 = vadd.f32 %v78, %v371
    %v481 = vadd.f32 %v79, %v373
    %v482 = vadd.f32 %v80, %v444
    %v483 = vadd.f32 %v81, %v446
    %v484 = vadd.f32 %v82, %v377
    %v485 = vadd.f32 %v83, %v379
    %v486 = vadd.f32 %v84, %v450
    %v487 = vadd.f32 %v85, %v452
    %v488 = vadd.f32 %v86, %v381
    %v489 = vadd.f32 %v87, %v383
    %v490 = vadd.f32 %v88, %v454
    %v491 = vadd.f32 %v89, %v456
    %v492 = vadd.f32 %v90, %v387
    %v493 = vadd.f32 %v91, %v389
    %v494 = vadd.f32 %v92, %v460
    %v495 = vadd.f32 %v93, %v462
    %v496 = vadd.f32 %v94, %v391
    %v497 = vadd.f32 %v95, %v393
    %v498 = vadd.f32 %v96, %v464
    %v499 = vadd.f32 %v97, %v466
    %500 = vst [vmem:[#allocation2] sm:$0xff] %v468
    %501 = vst [vmem:[#allocation2 + $0x8] sm:$0xff] %v469
    %502 = vst [vmem:[#allocation2 + $0x10] sm:$0xff] %v470
    %503 = vst [vmem:[#allocation2 + $0x18] sm:$0xff] %v471
    %504 = vst [vmem:[#allocation2 + $0x20] sm:$0xff] %v472
    %505 = vst [vmem:[#allocation2 + $0x28] sm:$0xff] %v473
    %506 = vst [vmem:[#allocation2 + $0x30] sm:$0xff] %v474
    %507 = vst [vmem:[#allocation2 + $0x38] sm:$0xff] %v475
    %508 = vst [vmem:[#allocation2 + $0x40] sm:$0xff] %v476
    %509 = vst [vmem:[#allocation2 + $0x48] sm:$0xff] %v477
    %510 = vst [vmem:[#allocation2 + $0x50] sm:$0xff] %v478
    %511 = vst [vmem:[#allocation2 + $0x58] sm:$0xff] %v479
    %512 = vst [vmem:[#allocation2 + $0x60] sm:$0xff] %v480
    %513 = vst [vmem:[#allocation2 + $0x68] sm:$0xff] %v481
    %514 = vst [vmem:[#allocation2 + $0x70] sm:$0xff] %v482
    %515 = vst [vmem:[#allocation2 + $0x78] sm:$0xff] %v483
    %516 = vst [vmem:[#allocation2 + $0x80] sm:$0xff] %v484
    %517 = vst [vmem:[#allocation2 + $0x88] sm:$0xff] %v485
    %518 = vst [vmem:[#allocation2 + $0x90] sm:$0xff] %v486
    %519 = vst [vmem:[#allocation2 + $0x98] sm:$0xff] %v487
    %520 = vst [vmem:[#allocation2 + $0xa0] sm:$0xff] %v488
    %521 = vst [vmem:[#allocation2 + $0xa8] sm:$0xff] %v489
    %522 = vst [vmem:[#allocation2 + $0xb0] sm:$0xff] %v490
    %523 = vst [vmem:[#allocation2 + $0xb8] sm:$0xff] %v491
    %524 = vst [vmem:[#allocation2 + $0xc0] sm:$0xff] %v492
    %525 = vst [vmem:[#allocation2 + $0xc8] sm:$0xff] %v493
    %526 = vst [vmem:[#allocation2 + $0xd0] sm:$0xff] %v494
    %527 = vst [vmem:[#allocation2 + $0xd8] sm:$0xff] %v495
    %528 = vst [vmem:[#allocation2 + $0xe0] sm:$0xff] %v496
    %529 = vst [vmem:[#allocation2 + $0xe8] sm:$0xff] %v497
    %530 = vst [vmem:[#allocation2 + $0xf0] sm:$0xff] %v498
    %531 = vst [vmem:[#allocation2 + $0xf8] sm:$0xff] %v499
    // Predicated region
    $region22: #{_lm_forward_padded.3} parent=1 // pred_check
      %p532 = pneg %p30
    $region23: #{_lm_forward_padded.3} parent=1 // pred_check_branch
      %534 = sbr.rel (%p532) target = $region25
    $region24: #{_lm_forward_padded.3} parent=1 // pred_region
      %v535 = vld [vmem:[#allocation2] sm:$0xff]
      %v536 = vld [vmem:[#allocation2 + $0x8] sm:$0xff]
      %v537 = vld [vmem:[#allocation2 + $0x10] sm:$0xff]
      %v538 = vld [vmem:[#allocation2 + $0x18] sm:$0xff]
      %v539 = vld [vmem:[#allocation2 + $0x20] sm:$0xff]
      %v540 = vld [vmem:[#allocation2 + $0x28] sm:$0xff]
      %v541 = vld [vmem:[#allocation2 + $0x30] sm:$0xff]
      %v542 = vld [vmem:[#allocation2 + $0x38] sm:$0xff]
      %v543 = vld [vmem:[#allocation2 + $0x40] sm:$0xff]
      %v544 = vld [vmem:[#allocation2 + $0x48] sm:$0xff]
      %v545 = vld [vmem:[#allocation2 + $0x50] sm:$0xff]
      %v546 = vld [vmem:[#allocation2 + $0x58] sm:$0xff]
      %v547 = vld [vmem:[#allocation2 + $0x60] sm:$0xff]
      %v548 = vld [vmem:[#allocation2 + $0x68] sm:$0xff]
      %v549 = vld [vmem:[#allocation2 + $0x70] sm:$0xff]
      %v550 = vld [vmem:[#allocation2 + $0x78] sm:$0xff]
      %v551 = vld [vmem:[#allocation2 + $0x80] sm:$0xff]
      %v552 = vld [vmem:[#allocation2 + $0x88] sm:$0xff]
      %v553 = vld [vmem:[#allocation2 + $0x90] sm:$0xff]
      %v554 = vld [vmem:[#allocation2 + $0x98] sm:$0xff]
      %v555 = vld [vmem:[#allocation2 + $0xa0] sm:$0xff]
      %v556 = vld [vmem:[#allocation2 + $0xa8] sm:$0xff]
      %v557 = vld [vmem:[#allocation2 + $0xb0] sm:$0xff]
      %v558 = vld [vmem:[#allocation2 + $0xb8] sm:$0xff]
      %v559 = vld [vmem:[#allocation2 + $0xc0] sm:$0xff]
      %v560 = vld [vmem:[#allocation2 + $0xc8] sm:$0xff]
      %v561 = vld [vmem:[#allocation2 + $0xd0] sm:$0xff]
      %v562 = vld [vmem:[#allocation2 + $0xd8] sm:$0xff]
      %v563 = vld [vmem:[#allocation2 + $0xe0] sm:$0xff]
      %v564 = vld [vmem:[#allocation2 + $0xe8] sm:$0xff]
      %v565 = vld [vmem:[#allocation2 + $0xf0] sm:$0xff]
      %v566 = vld [vmem:[#allocation2 + $0xf8] sm:$0xff]
      %v567 = vld [vmem:[%s2] sm:$0xf]
      %v569 = vlaneseq
      %v570 = vshrl.u32 %v569, 7
      %v571 = vsub.s32 0, %v570
      %v572 = vrot.slane %v567, %v571
      %v573 = vlaneseq
      %v574 = vshrl.u32 %v573, 7
      %v575 = vsub.s32 1, %v574
      %v576 = vrot.slane %v567, %v575
      %v577 = vlaneseq
      %v578 = vshrl.u32 %v577, 7
      %v579 = vsub.s32 2, %v578
      %v580 = vrot.slane %v567, %v579
      %v581 = vlaneseq
      %v582 = vshrl.u32 %v581, 7
      %v583 = vsub.s32 3, %v582
      %v584 = vrot.slane %v567, %v583
      %v589 = vadd.f32 %v535, %v572
      %v590 = vadd.f32 %v536, %v576
      %v591 = vadd.f32 %v537, %v580
      %v592 = vadd.f32 %v538, %v584
      %v593 = vadd.f32 %v539, %v572
      %v594 = vadd.f32 %v540, %v576
      %v595 = vadd.f32 %v541, %v580
      %v596 = vadd.f32 %v542, %v584
      %v597 = vadd.f32 %v543, %v572
      %v598 = vadd.f32 %v544, %v576
      %v599 = vadd.f32 %v545, %v580
      %v600 = vadd.f32 %v546, %v584
      %v601 = vadd.f32 %v547, %v572
      %v602 = vadd.f32 %v548, %v576
      %v603 = vadd.f32 %v549, %v580
      %v604 = vadd.f32 %v550, %v584
      %v605 = vadd.f32 %v551, %v572
      %v606 = vadd.f32 %v552, %v576
      %v607 = vadd.f32 %v553, %v580
      %v608 = vadd.f32 %v554, %v584
      %v609 = vadd.f32 %v555, %v572
      %v610 = vadd.f32 %v556, %v576
      %v611 = vadd.f32 %v557, %v580
      %v612 = vadd.f32 %v558, %v584
      %v613 = vadd.f32 %v559, %v572
      %v614 = vadd.f32 %v560, %v576
      %v615 = vadd.f32 %v561, %v580
      %v616 = vadd.f32 %v562, %v584
      %v617 = vadd.f32 %v563, %v572
      %v618 = vadd.f32 %v564, %v576
      %v619 = vadd.f32 %v565, %v580
      %v620 = vadd.f32 %v566, %v584
      %621 = vst [vmem:[#allocation6] sm:$0xff] %v589
      %622 = vst [vmem:[#allocation6 + $0x8] sm:$0xff] %v590
      %623 = vst [vmem:[#allocation6 + $0x10] sm:$0xff] %v591
      %624 = vst [vmem:[#allocation6 + $0x18] sm:$0xff] %v592
      %625 = vst [vmem:[#allocation6 + $0x20] sm:$0xff] %v593
      %626 = vst [vmem:[#allocation6 + $0x28] sm:$0xff] %v594
      %627 = vst [vmem:[#allocation6 + $0x30] sm:$0xff] %v595
      %628 = vst [vmem:[#allocation6 + $0x38] sm:$0xff] %v596
      %629 = vst [vmem:[#allocation6 + $0x40] sm:$0xff] %v597
      %630 = vst [vmem:[#allocation6 + $0x48] sm:$0xff] %v598
      %631 = vst [vmem:[#allocation6 + $0x50] sm:$0xff] %v599
      %632 = vst [vmem:[#allocation6 + $0x58] sm:$0xff] %v600
      %633 = vst [vmem:[#allocation6 + $0x60] sm:$0xff] %v601
      %634 = vst [vmem:[#allocation6 + $0x68] sm:$0xff] %v602
      %635 = vst [vmem:[#allocation6 + $0x70] sm:$0xff] %v603
      %636 = vst [vmem:[#allocation6 + $0x78] sm:$0xff] %v604
      %637 = vst [vmem:[#allocation6 + $0x80] sm:$0xff] %v605
      %638 = vst [vmem:[#allocation6 + $0x88] sm:$0xff] %v606
      %639 = vst [vmem:[#allocation6 + $0x90] sm:$0xff] %v607
      %640 = vst [vmem:[#allocation6 + $0x98] sm:$0xff] %v608
      %641 = vst [vmem:[#allocation6 + $0xa0] sm:$0xff] %v609
      %642 = vst [vmem:[#allocation6 + $0xa8] sm:$0xff] %v610
      %643 = vst [vmem:[#allocation6 + $0xb0] sm:$0xff] %v611
      %644 = vst [vmem:[#allocation6 + $0xb8] sm:$0xff] %v612
      %645 = vst [vmem:[#allocation6 + $0xc0] sm:$0xff] %v613
      %646 = vst [vmem:[#allocation6 + $0xc8] sm:$0xff] %v614
      %647 = vst [vmem:[#allocation6 + $0xd0] sm:$0xff] %v615
      %648 = vst [vmem:[#allocation6 + $0xd8] sm:$0xff] %v616
      %649 = vst [vmem:[#allocation6 + $0xe0] sm:$0xff] %v617
      %650 = vst [vmem:[#allocation6 + $0xe8] sm:$0xff] %v618
      %651 = vst [vmem:[#allocation6 + $0xf0] sm:$0xff] %v619
      %652 = vst [vmem:[#allocation6 + $0xf8] sm:$0xff] %v620
    $region25: #{_lm_forward_padded.3} parent=1 // pred_fallthru
      _
    // Predicated region
    $region26: #{_lm_forward_padded.3} parent=1 // pred_check
      _
    $region27: #{_lm_forward_padded.3} parent=1 // pred_check_branch
      %654 = sbr.rel (0) target = $region29
    $region28: #{_lm_forward_padded.3} parent=1 // pred_region
      %s656 = ssub.s32 4096, 4096
      %657 = vsyncadd [#allocation5], %s656
      %s658 = sshll.u32 [#allocation6], 4
      %s659 = int_to_ptr.vmem [resolvable:$true] %s658
      %664 = dma.vmem_to_hbm [thread:$0]  %s659, 4096, %s3, [#allocation5], 512, 512, 32
    $region29: #{_lm_forward_padded.3} parent=1 // pred_fallthru
      _
    // Predicated region
    $region30: #{_lm_forward_padded.3} parent=1 // pred_check
      _
    $region31: #{_lm_forward_padded.3} parent=1 // pred_check_branch
      %666 = sbr.rel (0) target = $region33
    $region32: #{_lm_forward_padded.3} parent=1 // pred_region
      %667 = dma.done [#allocation5], 4096
    $region33: #{_lm_forward_padded.3} parent=1 // pred_fallthru
      _
    %668 = vsyncpa [#allocation4], 1
    %669 = vsyncpa [#allocation5], 1

</llo_original>
